<compile_context>
chip_gen: v7x
topology: tpu7x:2x2x1
jax: 0.10.0
libtpu: 0.0.40
codegen_flags: <defaults>
</compile_context>

<pallas_src>
import functools

import jax
import jax.numpy as jnp
from jax.experimental import pallas as pl
from jax.experimental.pallas import tpu as pltpu


def _round_up(n, m):
    return (n + m - 1) // m * m


def _ss_residual_kernel(x_ref, xl_ref, xr_ref,
                        a1_ref, ib1_ref, w1_ref, b1_ref,
                        a2_ref, ib2_ref, w2_ref, b2_ref,
                        w3_ref, b3_ref,
                        o_ref):
    li = pl.program_id(1)          # L-tile index
    nl = pl.num_programs(1)

    x = x_ref[0].astype(jnp.float32)          # (TL, CP)
    TL, CP = x.shape
    C4P = w2_ref.shape[1]

    a1 = a1_ref[...]                          # (1, CP) = exp(alpha)
    ib1 = ib1_ref[...]                        # (1, CP) = 1/(exp(beta)+eps)

    def snake1(v):                            # SnakeBeta #1 (f32 VPU/EUP path)
        s = jnp.sin(v * a1)
        return v + ib1 * s * s

    # SnakeBeta on this tile and on the two halo rows (t = l*TL-1 and t = (l+1)*TL).
    y = snake1(x)                                             # (TL, CP)
    y_left = snake1(xl_ref[0][7:8, :].astype(jnp.float32))    # (1, CP)
    y_right = snake1(xr_ref[0][0:1, :].astype(jnp.float32))   # (1, CP)
    y_left = jnp.where(li == 0, 0.0, y_left)                  # "same" zero pad at t = -1
    y_right = jnp.where(li == nl - 1, 0.0, y_right)           # and at t = L

    # k=3 "same" conv as ONE fused matmul: [y(t-1) | y(t) | y(t+1)] @ (3*CP, CP).
    y_prev = jnp.concatenate([y_left, y[:-1, :]], axis=0)     # y[t-1]
    y_next = jnp.concatenate([y[1:, :], y_right], axis=0)     # y[t+1]
    y3 = jnp.concatenate([y_prev, y, y_next], axis=-1).astype(jnp.bfloat16)
    yc = jnp.dot(y3, w1_ref[...], preferred_element_type=jnp.float32) + b1_ref[...]

    # SnakeBeta #2 (f32).
    s2 = jnp.sin(yc * a2_ref[...])
    y2 = yc + ib2_ref[...] * s2 * s2
    y2b = y2.astype(jnp.bfloat16)

    # 1x1 convs C -> 4C -> C, chunked over the 4C hidden dim (bounds the live
    # intermediate to (TL, HC) instead of (TL, 4C)).  Static 128-aligned slices.
    HC = min(512, C4P)
    while C4P % HC:
        HC //= 2
    acc = jnp.zeros((TL, CP), jnp.float32)
    for k in range(C4P // HC):
        k0 = k * HC
        h = (jnp.dot(y2b, w2_ref[:, k0:k0 + HC], preferred_element_type=jnp.float32)
             + b2_ref[:, k0:k0 + HC])
        acc = acc + jnp.dot(h.astype(jnp.bfloat16), w3_ref[k0:k0 + HC, :],
                            preferred_element_type=jnp.float32)
    out = acc + b3_ref[...]

    # Residual.
    o_ref[0] = (x + out).astype(o_ref.dtype)


def ss_residual_unit(x_ncl, params, tl=256):
    """x_ncl: (B, C, L); params: dict from make_params (lane-padded, bf16 weights)."""
    B, C, L = x_ncl.shape
    CP = params["w1"].shape[1]          # padded channel count (multiple of 128)
    C4P = params["w2"].shape[1]         # padded hidden count  (multiple of 128)

    # Channels-last, pad channels to CP and length to a multiple of the L tile.
    # TODO(synk): for production keep the surrounding model channels-last so these
    # wrapper transposes disappear.
    x = jnp.transpose(x_ncl, (0, 2, 1))                     # (B, L, C)
    TL = _round_up(min(tl, _round_up(L, 8)), 8)
    Lp = _round_up(L, TL)
    x = jnp.pad(x, ((0, 0), (0, Lp - L), (0, CP - C)))      # (B, Lp, CP)
    nl = Lp // TL
    tlb = TL // 8                                           # 8-row blocks per tile
    nb8 = Lp // 8

    def fixed(shape):
        return pl.BlockSpec(shape, lambda b, l: (0,) * len(shape))

    in_specs = [
        # main x tile
        pl.BlockSpec((1, TL, CP), lambda b, l: (b, l, 0)),
        # left halo: 8-row block ending at row l*TL-1 (use row 7); clamped at l=0
        pl.BlockSpec((1, 8, CP),
                     lambda b, l: (b, jnp.maximum(l * tlb - 1, 0), 0)),
        # right halo: 8-row block starting at row (l+1)*TL (use row 0); clamped at end
        pl.BlockSpec((1, 8, CP),
                     lambda b, l: (b, jnp.minimum((l + 1) * tlb, nb8 - 1), 0)),
        fixed((1, CP)), fixed((1, CP)),        # a1, ib1
        fixed((3 * CP, CP)), fixed((1, CP)),   # w1 (fused taps), b1
        fixed((1, CP)), fixed((1, CP)),        # a2, ib2
        fixed((CP, C4P)), fixed((1, C4P)),     # w2, b2
        fixed((C4P, CP)), fixed((1, CP)),      # w3, b3
    ]

    out = pl.pallas_call(
        _ss_residual_kernel,
        out_shape=jax.ShapeDtypeStruct((B, Lp, CP), x_ncl.dtype),
        grid_spec=pltpu.PrefetchScalarGridSpec(
            num_scalar_prefetch=0,
            grid=(B, nl),
            in_specs=in_specs,
            out_specs=pl.BlockSpec((1, TL, CP), lambda b, l: (b, l, 0)),
        ),
        compiler_params=pltpu.CompilerParams(
            # halo is loaded per tile, so both grid axes are independent -> can be
            # sharded across the two TensorCores on v7x.
            dimension_semantics=("parallel", "parallel"),
            vmem_limit_bytes=48 * 1024 * 1024,
        ),
    )(x, x, x,
      params["a1"], params["ib1"], params["w1"], params["b1"],
      params["a2"], params["ib2"], params["w2"], params["b2"],
      params["w3"], params["b3"])

    out = out[:, :L, :C]
    return jnp.transpose(out, (0, 2, 1))        # back to (B, C, L)


# ------------------------- parameter preparation ----------------------------

def _wn_conv_weights(key, out_ch, in_ch, k):
    """weight_norm(Conv1d): w = g * v / ||v||_(in,k); deterministic synthetic init."""
    kv, kg, kb = jax.random.split(key, 3)
    v = jax.random.normal(kv, (out_ch, in_ch, k), dtype=jnp.float32) * 0.1
    g = jax.random.uniform(kg, (out_ch, 1, 1), dtype=jnp.float32,
                           minval=0.5, maxval=1.5)
    norm = jnp.sqrt(jnp.sum(v * v, axis=(1, 2), keepdims=True))
    w = g * v / norm                           # (out, in, k)
    b = jax.random.normal(kb, (out_ch,), dtype=jnp.float32) * 0.1
    return w, b


def make_params(key, dim=16, kernel_size=3):
    assert kernel_size == 3
    k1, k2, k3 = jax.random.split(key, 3)
    C, C4 = dim, 4 * dim
    CP = _round_up(C, 128)        # lane-pad channels
    C4P = _round_up(C4, 128)      # lane-pad hidden

    # SnakeBeta (alpha_logscale=True): alpha = beta = zeros -> exp(.) = 1
    alpha1 = jnp.zeros((C,), jnp.float32)
    beta1 = jnp.zeros((C,), jnp.float32)
    alpha2 = jnp.zeros((C,), jnp.float32)
    beta2 = jnp.zeros((C,), jnp.float32)
    eps = 1e-9

    w1_oik, b1 = _wn_conv_weights(k1, C, C, kernel_size)     # (C, C, 3)
    w2_oik, b2 = _wn_conv_weights(k2, C4, C, 1)              # (4C, C, 1)
    w3_oik, b3 = _wn_conv_weights(k3, C, C4, 1)              # (C, 4C, 1)

    def pad_row(v, n):
        return jnp.pad(v, (0, n - v.shape[0])).reshape(1, n).astype(jnp.float32)

    # fused k=3 weight: (3, Cin, Cout) zero-padded to (3, CP, CP) -> (3*CP, CP)
    w1_kio = jnp.transpose(w1_oik, (2, 1, 0))                              # (3, Cin, Cout)
    w1_fused = (jnp.zeros((3, CP, CP), jnp.float32)
                .at[:, :C, :C].set(w1_kio).reshape(3 * CP, CP))

    w2_io = jnp.zeros((CP, C4P), jnp.float32).at[:C, :C4].set(
        jnp.transpose(w2_oik[:, :, 0]))                                    # (CP, C4P)
    w3_io = jnp.zeros((C4P, CP), jnp.float32).at[:C4, :C].set(
        jnp.transpose(w3_oik[:, :, 0]))                                    # (C4P, CP)

    return dict(
        a1=pad_row(jnp.exp(alpha1), CP),
        ib1=pad_row(1.0 / (jnp.exp(beta1) + eps), CP),
        a2=pad_row(jnp.exp(alpha2), CP),
        ib2=pad_row(1.0 / (jnp.exp(beta2) + eps), CP),
        w1=w1_fused.astype(jnp.bfloat16),
        b1=pad_row(b1, CP),
        w2=w2_io.astype(jnp.bfloat16),
        b2=pad_row(b2, C4P),
        w3=w3_io.astype(jnp.bfloat16),
        b3=pad_row(b3, CP),
    )


# ------------------------------- reference ----------------------------------

def _reference(x_ncl, params):
    """Pure-JAX channels-last reference with the same bf16 matmul quantization."""
    B, C, L = x_ncl.shape
    CP = params["w1"].shape[1]
    x = jnp.transpose(x_ncl, (0, 2, 1))                      # (B, L, C)
    xp = jnp.pad(x, ((0, 0), (0, 0), (0, CP - C)))           # (B, L, CP)

    s = jnp.sin(xp * params["a1"])
    y = xp + params["ib1"] * s * s
    y_prev = jnp.pad(y, ((0, 0), (1, 0), (0, 0)))[:, :-1, :]
    y_next = jnp.pad(y, ((0, 0), (0, 1), (0, 0)))[:, 1:, :]
    y3 = jnp.concatenate([y_prev, y, y_next], axis=-1).astype(jnp.bfloat16)
    yc = jnp.einsum("blk,kc->blc", y3, params["w1"],
                    preferred_element_type=jnp.float32) + params["b1"]

    s2 = jnp.sin(yc * params["a2"])
    y2 = yc + params["ib2"] * s2 * s2
    h = jnp.einsum("blc,ch->blh", y2.astype(jnp.bfloat16), params["w2"],
                   preferred_element_type=jnp.float32) + params["b2"]
    o = jnp.einsum("blh,hc->blc", h.astype(jnp.bfloat16), params["w3"],
                   preferred_element_type=jnp.float32) + params["b3"]
    out = xp + o
    return jnp.transpose(out[:, :, :C], (0, 2, 1))


# --------------------------------- main --------------------------------------

if __name__ == "__main__":
    key = jax.random.PRNGKey(0)
    kx, kp = jax.random.split(key)

    B, C, L = 2, 16, 16                        # NCL, dim=16 (module default)
    x = jax.random.normal(kx, (B, C, L), dtype=jnp.float32)
    params = make_params(kp, dim=C, kernel_size=3)

    # tl=8 -> two L-tiles, exercising the cross-tile conv halo path.
    out = ss_residual_unit(x, params, tl=8)
    out = jax.block_until_ready(out)

    assert out.shape == (B, C, L) and out.dtype == jnp.float32
    assert bool(jnp.all(jnp.isfinite(out)))

    ref = _reference(x, params)
    err = float(jnp.max(jnp.abs(out - ref)))
    assert err < 1e-2, f"max abs error vs reference: {err}"
    print("KERNEL_OK")
</pallas_src>

<mosaic_0001>
module attributes {stable_mosaic.version = 11 : i64} {
  func.func @_ss_residual_kernel(%arg0: i32, %arg1: i32, %arg2: memref<1x8x128xf32, #tpu.memory_space<vmem>>, %arg3: memref<1x8x128xf32, #tpu.memory_space<vmem>>, %arg4: memref<1x8x128xf32, #tpu.memory_space<vmem>>, %arg5: memref<1x128xf32, #tpu.memory_space<vmem>>, %arg6: memref<1x128xf32, #tpu.memory_space<vmem>>, %arg7: memref<384x128xbf16, #tpu.memory_space<vmem>>, %arg8: memref<1x128xf32, #tpu.memory_space<vmem>>, %arg9: memref<1x128xf32, #tpu.memory_space<vmem>>, %arg10: memref<1x128xf32, #tpu.memory_space<vmem>>, %arg11: memref<128x128xbf16, #tpu.memory_space<vmem>>, %arg12: memref<1x128xf32, #tpu.memory_space<vmem>>, %arg13: memref<128x128xbf16, #tpu.memory_space<vmem>>, %arg14: memref<1x128xf32, #tpu.memory_space<vmem>>, %arg15: memref<1x8x128xf32, #tpu.memory_space<vmem>>) attributes {dimension_semantics = [#tpu.dimension_semantics<parallel>, #tpu.dimension_semantics<parallel>], iteration_bounds = array<i64: 2, 2>, scalar_prefetch = 0 : i64, scratch_operands = 0 : i64, tpu.core_type = #tpu.core_type<tc>, window_params = [{transform_indices = @transform_0, window_bounds = array<i64: 1, 8, 128>}, {transform_indices = @transform_1, window_bounds = array<i64: 1, 8, 128>}, {transform_indices = @transform_2, window_bounds = array<i64: 1, 8, 128>}, {pipeline_mode = #tpu.pipeline_mode<synchronous>, transform_indices = @transform_3, window_bounds = array<i64: 1, 128>}, {pipeline_mode = #tpu.pipeline_mode<synchronous>, transform_indices = @transform_4, window_bounds = array<i64: 1, 128>}, {pipeline_mode = #tpu.pipeline_mode<synchronous>, transform_indices = @transform_5, window_bounds = array<i64: 384, 128>}, {pipeline_mode = #tpu.pipeline_mode<synchronous>, transform_indices = @transform_6, window_bounds = array<i64: 1, 128>}, {pipeline_mode = #tpu.pipeline_mode<synchronous>, transform_indices = @transform_7, window_bounds = array<i64: 1, 128>}, {pipeline_mode = #tpu.pipeline_mode<synchronous>, transform_indices = @transform_8, window_bounds = array<i64: 1, 128>}, {pipeline_mode = #tpu.pipeline_mode<synchronous>, transform_indices = @transform_9, window_bounds = array<i64: 128, 128>}, {pipeline_mode = #tpu.pipeline_mode<synchronous>, transform_indices = @transform_10, window_bounds = array<i64: 1, 128>}, {pipeline_mode = #tpu.pipeline_mode<synchronous>, transform_indices = @transform_11, window_bounds = array<i64: 128, 128>}, {pipeline_mode = #tpu.pipeline_mode<synchronous>, transform_indices = @transform_12, window_bounds = array<i64: 1, 128>}, {transform_indices = @transform_13, window_bounds = array<i64: 1, 8, 128>}]} {
    %c0 = arith.constant 0 : index
    %c0_0 = arith.constant 0 : index
    %c0_1 = arith.constant 0 : index
    %0 = vector.load %arg2[%c0, %c0_0, %c0_1] : memref<1x8x128xf32, #tpu.memory_space<vmem>>, vector<1x8x128xf32>
    %1 = vector.shape_cast %0 : vector<1x8x128xf32> to vector<8x128xf32>
    %c0_2 = arith.constant 0 : index
    %c0_3 = arith.constant 0 : index
    %2 = vector.load %arg5[%c0_2, %c0_3] : memref<1x128xf32, #tpu.memory_space<vmem>>, vector<1x128xf32>
    %c0_4 = arith.constant 0 : index
    %c0_5 = arith.constant 0 : index
    %3 = vector.load %arg6[%c0_4, %c0_5] : memref<1x128xf32, #tpu.memory_space<vmem>>, vector<1x128xf32>
    %4 = vector.broadcast %2 : vector<1x128xf32> to vector<8x128xf32>
    %5 = arith.mulf %1, %4 : vector<8x128xf32>
    %6 = math.sin %5 : vector<8x128xf32>
    %7 = vector.broadcast %3 : vector<1x128xf32> to vector<8x128xf32>
    %8 = arith.mulf %7, %6 : vector<8x128xf32>
    %9 = arith.mulf %8, %6 : vector<8x128xf32>
    %10 = arith.addf %1, %9 : vector<8x128xf32>
    %c0_6 = arith.constant 0 : index
    %c0_7 = arith.constant 0 : index
    %c0_8 = arith.constant 0 : index
    %11 = vector.load %arg3[%c0_6, %c0_7, %c0_8] : memref<1x8x128xf32, #tpu.memory_space<vmem>>, vector<1x8x128xf32>
    %12 = vector.shape_cast %11 : vector<1x8x128xf32> to vector<8x128xf32>
    %13 = vector.extract_strided_slice %12 {offsets = [7, 0], sizes = [1, 128], strides = [1, 1]} : vector<8x128xf32> to vector<1x128xf32>
    %14 = arith.mulf %13, %2 : vector<1x128xf32>
    %15 = math.sin %14 : vector<1x128xf32>
    %16 = arith.mulf %3, %15 : vector<1x128xf32>
    %17 = arith.mulf %16, %15 : vector<1x128xf32>
    %18 = arith.addf %13, %17 : vector<1x128xf32>
    %c0_9 = arith.constant 0 : index
    %c0_10 = arith.constant 0 : index
    %c0_11 = arith.constant 0 : index
    %19 = vector.load %arg4[%c0_9, %c0_10, %c0_11] : memref<1x8x128xf32, #tpu.memory_space<vmem>>, vector<1x8x128xf32>
    %20 = vector.shape_cast %19 : vector<1x8x128xf32> to vector<8x128xf32>
    %21 = vector.extract_strided_slice %20 {offsets = [0, 0], sizes = [1, 128], strides = [1, 1]} : vector<8x128xf32> to vector<1x128xf32>
    %22 = arith.mulf %21, %2 : vector<1x128xf32>
    %23 = math.sin %22 : vector<1x128xf32>
    %24 = arith.mulf %3, %23 : vector<1x128xf32>
    %25 = arith.mulf %24, %23 : vector<1x128xf32>
    %26 = arith.addf %21, %25 : vector<1x128xf32>
    %c0_i32 = arith.constant 0 : i32
    %27 = arith.cmpi eq, %arg1, %c0_i32 : i32
    %cst = arith.constant 0.000000e+00 : f32
    %28 = vector.broadcast %cst : f32 to vector<1x128xf32>
    %29 = arith.select %27, %28, %18 : vector<1x128xf32>
    %c1_i32 = arith.constant 1 : i32
    %30 = arith.cmpi eq, %arg1, %c1_i32 : i32
    %cst_12 = arith.constant 0.000000e+00 : f32
    %31 = vector.broadcast %cst_12 : f32 to vector<1x128xf32>
    %32 = arith.select %30, %31, %26 : vector<1x128xf32>
    %33 = vector.extract_strided_slice %10 {offsets = [0, 0], sizes = [7, 128], strides = [1, 1]} : vector<8x128xf32> to vector<7x128xf32>
    %34 = tpu.concatenate %29, %33 in 0 : vector<1x128xf32>, vector<7x128xf32> -> vector<8x128xf32>
    %35 = vector.extract_strided_slice %10 {offsets = [1, 0], sizes = [7, 128], strides = [1, 1]} : vector<8x128xf32> to vector<7x128xf32>
    %36 = tpu.concatenate %35, %32 in 0 : vector<7x128xf32>, vector<1x128xf32> -> vector<8x128xf32>
    %37 = tpu.concatenate %34, %10, %36 in 1 : vector<8x128xf32>, vector<8x128xf32>, vector<8x128xf32> -> vector<8x384xf32>
    %38 = arith.truncf %37 : vector<8x384xf32> to vector<8x384xbf16>
    %c0_13 = arith.constant 0 : index
    %c0_14 = arith.constant 0 : index
    %39 = vector.load %arg7[%c0_13, %c0_14] : memref<384x128xbf16, #tpu.memory_space<vmem>>, vector<384x128xbf16>
    %cst_15 = arith.constant dense<0.000000e+00> : vector<8x128xf32>
    %40 = tpu.matmul %38, %39, %cst_15 {dimension_numbers = #tpu.dot_dimension_numbers<[1], [0], [0], [1], [0, 0, 1, 1], [], []>} : vector<8x384xbf16>, vector<384x128xbf16>, vector<8x128xf32> -> vector<8x128xf32>
    %c0_16 = arith.constant 0 : index
    %c0_17 = arith.constant 0 : index
    %41 = vector.load %arg8[%c0_16, %c0_17] : memref<1x128xf32, #tpu.memory_space<vmem>>, vector<1x128xf32>
    %42 = vector.broadcast %41 : vector<1x128xf32> to vector<8x128xf32>
    %43 = arith.addf %40, %42 : vector<8x128xf32>
    %c0_18 = arith.constant 0 : index
    %c0_19 = arith.constant 0 : index
    %44 = vector.load %arg9[%c0_18, %c0_19] : memref<1x128xf32, #tpu.memory_space<vmem>>, vector<1x128xf32>
    %45 = vector.broadcast %44 : vector<1x128xf32> to vector<8x128xf32>
    %46 = arith.mulf %43, %45 : vector<8x128xf32>
    %47 = math.sin %46 : vector<8x128xf32>
    %c0_20 = arith.constant 0 : index
    %c0_21 = arith.constant 0 : index
    %48 = vector.load %arg10[%c0_20, %c0_21] : memref<1x128xf32, #tpu.memory_space<vmem>>, vector<1x128xf32>
    %49 = vector.broadcast %48 : vector<1x128xf32> to vector<8x128xf32>
    %50 = arith.mulf %49, %47 : vector<8x128xf32>
    %51 = arith.mulf %50, %47 : vector<8x128xf32>
    %52 = arith.addf %43, %51 : vector<8x128xf32>
    %53 = arith.truncf %52 : vector<8x128xf32> to vector<8x128xbf16>
    %cst_22 = arith.constant 0.000000e+00 : f32
    %54 = vector.broadcast %cst_22 : f32 to vector<8x128xf32>
    %c0_23 = arith.constant 0 : index
    %c0_24 = arith.constant 0 : index
    %55 = vector.load %arg11[%c0_23, %c0_24] : memref<128x128xbf16, #tpu.memory_space<vmem>>, vector<128x128xbf16>
    %cst_25 = arith.constant dense<0.000000e+00> : vector<8x128xf32>
    %56 = tpu.matmul %53, %55, %cst_25 {dimension_numbers = #tpu.dot_dimension_numbers<[1], [0], [0], [1], [0, 0, 1, 1], [], []>} : vector<8x128xbf16>, vector<128x128xbf16>, vector<8x128xf32> -> vector<8x128xf32>
    %c0_26 = arith.constant 0 : index
    %c0_27 = arith.constant 0 : index
    %57 = vector.load %arg12[%c0_26, %c0_27] : memref<1x128xf32, #tpu.memory_space<vmem>>, vector<1x128xf32>
    %58 = vector.broadcast %57 : vector<1x128xf32> to vector<8x128xf32>
    %59 = arith.addf %56, %58 : vector<8x128xf32>
    %60 = arith.truncf %59 : vector<8x128xf32> to vector<8x128xbf16>
    %c0_28 = arith.constant 0 : index
    %c0_29 = arith.constant 0 : index
    %61 = vector.load %arg13[%c0_28, %c0_29] : memref<128x128xbf16, #tpu.memory_space<vmem>>, vector<128x128xbf16>
    %cst_30 = arith.constant dense<0.000000e+00> : vector<8x128xf32>
    %62 = tpu.matmul %60, %61, %cst_30 {dimension_numbers = #tpu.dot_dimension_numbers<[1], [0], [0], [1], [0, 0, 1, 1], [], []>} : vector<8x128xbf16>, vector<128x128xbf16>, vector<8x128xf32> -> vector<8x128xf32>
    %63 = arith.addf %54, %62 : vector<8x128xf32>
    %c0_31 = arith.constant 0 : index
    %c0_32 = arith.constant 0 : index
    %64 = vector.load %arg14[%c0_31, %c0_32] : memref<1x128xf32, #tpu.memory_space<vmem>>, vector<1x128xf32>
    %65 = vector.broadcast %64 : vector<1x128xf32> to vector<8x128xf32>
    %66 = arith.addf %63, %65 : vector<8x128xf32>
    %67 = arith.addf %1, %66 : vector<8x128xf32>
    %c0_33 = arith.constant 0 : index
    %c0_34 = arith.constant 0 : index
    %c0_35 = arith.constant 0 : index
    %68 = vector.load %arg15[%c0_33, %c0_34, %c0_35] : memref<1x8x128xf32, #tpu.memory_space<vmem>>, vector<1x8x128xf32>
    %69 = vector.shape_cast %68 : vector<1x8x128xf32> to vector<8x128xf32>
    %70 = vector.shape_cast %67 : vector<8x128xf32> to vector<1x8x128xf32>
    tpu.vector_store %arg15[%c0_33, %c0_34, %c0_35], %70 {strides = array<i32>} : memref<1x8x128xf32, #tpu.memory_space<vmem>>, vector<1x8x128xf32>,
    return
  }
  func.func @transform_0(%arg0: i32, %arg1: i32) -> (i32, i32, i32) {
    %c0_i32 = arith.constant 0 : i32
    %c0_i32_0 = arith.constant 0 : i32
    return %arg0, %arg1, %c0_i32 : i32, i32, i32
  }
  func.func @transform_1(%arg0: i32, %arg1: i32) -> (i32, i32, i32) {
    %c1_i32 = arith.constant 1 : i32
    %0 = arith.muli %arg1, %c1_i32 : i32
    %c1_i32_0 = arith.constant 1 : i32
    %1 = arith.subi %0, %c1_i32_0 : i32
    %c0_i32 = arith.constant 0 : i32
    %2 = arith.maxsi %1, %c0_i32 : i32
    %c0_i32_1 = arith.constant 0 : i32
    %c0_i32_2 = arith.constant 0 : i32
    return %arg0, %2, %c0_i32_1 : i32, i32, i32
  }
  func.func @transform_2(%arg0: i32, %arg1: i32) -> (i32, i32, i32) {
    %c1_i32 = arith.constant 1 : i32
    %0 = arith.addi %arg1, %c1_i32 : i32
    %c1_i32_0 = arith.constant 1 : i32
    %1 = arith.muli %0, %c1_i32_0 : i32
    %c1_i32_1 = arith.constant 1 : i32
    %2 = arith.minsi %1, %c1_i32_1 : i32
    %c0_i32 = arith.constant 0 : i32
    %c0_i32_2 = arith.constant 0 : i32
    return %arg0, %2, %c0_i32 : i32, i32, i32
  }
  func.func @transform_3(%arg0: i32, %arg1: i32) -> (i32, i32) {
    %c0_i32 = arith.constant 0 : i32
    %c0_i32_0 = arith.constant 0 : i32
    %c0_i32_1 = arith.constant 0 : i32
    return %c0_i32, %c0_i32_0 : i32, i32
  }
  func.func @transform_4(%arg0: i32, %arg1: i32) -> (i32, i32) {
    %c0_i32 = arith.constant 0 : i32
    %c0_i32_0 = arith.constant 0 : i32
    %c0_i32_1 = arith.constant 0 : i32
    return %c0_i32, %c0_i32_0 : i32, i32
  }
  func.func @transform_5(%arg0: i32, %arg1: i32) -> (i32, i32) {
    %c0_i32 = arith.constant 0 : i32
    %c0_i32_0 = arith.constant 0 : i32
    %c0_i32_1 = arith.constant 0 : i32
    return %c0_i32, %c0_i32_0 : i32, i32
  }
  func.func @transform_6(%arg0: i32, %arg1: i32) -> (i32, i32) {
    %c0_i32 = arith.constant 0 : i32
    %c0_i32_0 = arith.constant 0 : i32
    %c0_i32_1 = arith.constant 0 : i32
    return %c0_i32, %c0_i32_0 : i32, i32
  }
  func.func @transform_7(%arg0: i32, %arg1: i32) -> (i32, i32) {
    %c0_i32 = arith.constant 0 : i32
    %c0_i32_0 = arith.constant 0 : i32
    %c0_i32_1 = arith.constant 0 : i32
    return %c0_i32, %c0_i32_0 : i32, i32
  }
  func.func @transform_8(%arg0: i32, %arg1: i32) -> (i32, i32) {
    %c0_i32 = arith.constant 0 : i32
    %c0_i32_0 = arith.constant 0 : i32
    %c0_i32_1 = arith.constant 0 : i32
    return %c0_i32, %c0_i32_0 : i32, i32
  }
  func.func @transform_9(%arg0: i32, %arg1: i32) -> (i32, i32) {
    %c0_i32 = arith.constant 0 : i32
    %c0_i32_0 = arith.constant 0 : i32
    %c0_i32_1 = arith.constant 0 : i32
    return %c0_i32, %c0_i32_0 : i32, i32
  }
  func.func @transform_10(%arg0: i32, %arg1: i32) -> (i32, i32) {
    %c0_i32 = arith.constant 0 : i32
    %c0_i32_0 = arith.constant 0 : i32
    %c0_i32_1 = arith.constant 0 : i32
    return %c0_i32, %c0_i32_0 : i32, i32
  }
  func.func @transform_11(%arg0: i32, %arg1: i32) -> (i32, i32) {
    %c0_i32 = arith.constant 0 : i32
    %c0_i32_0 = arith.constant 0 : i32
    %c0_i32_1 = arith.constant 0 : i32
    return %c0_i32, %c0_i32_0 : i32, i32
  }
  func.func @transform_12(%arg0: i32, %arg1: i32) -> (i32, i32) {
    %c0_i32 = arith.constant 0 : i32
    %c0_i32_0 = arith.constant 0 : i32
    %c0_i32_1 = arith.constant 0 : i32
    return %c0_i32, %c0_i32_0 : i32, i32
  }
  func.func @transform_13(%arg0: i32, %arg1: i32) -> (i32, i32, i32) {
    %c0_i32 = arith.constant 0 : i32
    %c0_i32_0 = arith.constant 0 : i32
    return %arg0, %arg1, %c0_i32 : i32, i32, i32
  }
}

</mosaic_0001>

<llo_original>
// kernel: tpu_custom_call.1
$region0: #{tpu_custom_call.1}
  #allocation0 [shape = 'u32[]', space=smem, size = 0x4, offset = 0x4, fixed_abs, tag = 'smem constant byte address 0x4 - core index']
  #allocation1 [shape = 'u32[144,128]{1,0:T(1,128)}', space=vmem, size = 0x12000, scoped, tag = 'internal scratch']
  %s0 = inlined_call_operand.hbm [shape: f32[2,16,128], index: 0, kind: input, shape index: {}]
  %s1 = inlined_call_operand.hbm [shape: f32[2,16,128], index: 1, kind: input, shape index: {}]
  %s2 = inlined_call_operand.hbm [shape: f32[2,16,128], index: 2, kind: input, shape index: {}]
  %s3 = inlined_call_operand.vmem [shape: f32[1,128], index: 3, kind: input, shape index: {}]
  %s4 = inlined_call_operand.vmem [shape: f32[1,128], index: 4, kind: input, shape index: {}]
  %s5 = inlined_call_operand.hbm [shape: bf16[384,128], index: 5, kind: input, shape index: {}]
  %s6 = inlined_call_operand.vmem [shape: f32[1,128], index: 6, kind: input, shape index: {}]
  %s7 = inlined_call_operand.vmem [shape: f32[1,128], index: 7, kind: input, shape index: {}]
  %s8 = inlined_call_operand.vmem [shape: f32[1,128], index: 8, kind: input, shape index: {}]
  %s9 = inlined_call_operand.hbm [shape: bf16[128,128], index: 9, kind: input, shape index: {}]
  %s10 = inlined_call_operand.vmem [shape: f32[1,128], index: 10, kind: input, shape index: {}]
  %s11 = inlined_call_operand.hbm [shape: bf16[128,128], index: 11, kind: input, shape index: {}]
  %s12 = inlined_call_operand.vmem [shape: f32[1,128], index: 12, kind: input, shape index: {}]
  %s13 = inlined_call_operand.hbm [shape: f32[2,16,128], index: 13, kind: output, shape index: {}]
  %s14 = sld [smem:[#allocation0]]
  $region109: #{tpu_custom_call.1} parent=0
    _
  %s16 = ssub.s32 1, %s14
  %s17 = scalar_select 0, %s16, %s14
  $region1: #{tpu_custom_call.1} parent=0
    #allocation2 [shape = 'u8[8192]{0}', space=vmem, size = 0x2000, scoped, tag = 'input window, operand 0']
    #allocation3 [shape = 's32[2]{0}', space=sflag, size = 0x8, scoped, tag = 'scoped memory for tpu_custom_call.1']
    #allocation4 [shape = 's32[2]{0}', space=sflag, size = 0x8, scoped, tag = 'scoped memory for tpu_custom_call.1']
    #allocation5 [shape = 'u8[8192]{0}', space=vmem, size = 0x2000, scoped, tag = 'input window, operand 1']
    #allocation6 [shape = 's32[2]{0}', space=sflag, size = 0x8, scoped, tag = 'scoped memory for tpu_custom_call.1']
    #allocation7 [shape = 'u8[8192]{0}', space=vmem, size = 0x2000, scoped, tag = 'input window, operand 2']
    #allocation8 [shape = 'u8[98304]{0}', space=vmem, size = 0x18000, scoped, tag = 'input window, operand 5, single buffered']
    #allocation9 [shape = 's32[1]{0}', space=sflag, size = 0x4, scoped, tag = 'scoped memory for tpu_custom_call.1']
    #allocation10 [shape = 'u8[32768]{0}', space=vmem, size = 0x8000, scoped, tag = 'input window, operand 9, single buffered']
    #allocation11 [shape = 'u8[32768]{0}', space=vmem, size = 0x8000, scoped, tag = 'input window, operand 11, single buffered']
    #allocation12 [shape = 's32[1]{0}', space=sflag, size = 0x4, scoped, tag = 'scoped memory for tpu_custom_call.1']
    #allocation13 [shape = 'u8[8192]{0}', space=vmem, size = 0x2000, scoped, tag = 'output window, operand 0']
    %18 = vsyncpa [#allocation3], 0
    %s19 = scalar_lea.sflag [#allocation3], 1
    %20 = vsyncpa %s19, 0
    %21 = vsyncpa [#allocation6], 0
    %s22 = scalar_lea.sflag [#allocation6], 1
    %23 = vsyncpa %s22, 0
    %24 = vsyncpa [#allocation9], 0
    %25 = vsyncpa [#allocation12], 0
    %26 = vsyncpa [#allocation4], 0
    %s27 = scalar_lea.sflag [#allocation4], 1
    %28 = vsyncpa %s27, 0
    loop: start=0, step=1, limit=6
    $region2: #{tpu_custom_call.1} parent=1 // loop_pre_header
      _
    $region3: #{tpu_custom_call.1} parent=1 // loop_header
      %s30 = sphi 0, %s34
      %p31 = scmp.ge.s32.totalorder %s30, 6
      %s37 = sphi 0, %s49
      %s38 = sphi 0, %s45
      %s39 = sphi 0, %s37
      %s40 = sphi 0, %s38
      %s41 = sphi 0, %s39
      %s42 = sphi 0, %s40
      %s54 = sphi 0, %s56
      %s57 = sphi 0, %s54
      %s58 = sphi 0, %s57
      %s74 = sphi 0, %s58
      %s88 = sphi 0, %s90
      %s91 = sphi 0, %s88
      %s92 = sphi 0, %s91
      %s108 = sphi 0, %s92
      %s122 = sphi 0, %s124
      %s125 = sphi 0, %s122
      %s126 = sphi 0, %s125
      %s142 = sphi 0, %s126
      %s146 = sphi 0, %s146
      %s148 = sphi 0, %s146
      %s149 = sphi 0, %s148
      %s163 = sphi 0, %s149
      %s167 = sphi 0, %s167
      %s169 = sphi 0, %s167
      %s170 = sphi 0, %s169
      %s184 = sphi 0, %s170
      %s188 = sphi 0, %s188
      %s190 = sphi 0, %s188
      %s191 = sphi 0, %s190
      %s205 = sphi 0, %s191
      %s209 = sphi 0, %s209
      %s211 = sphi 0, %s209
      %s212 = sphi 0, %s211
      %s226 = sphi 0, %s212
      %s230 = sphi 0, %s230
      %s232 = sphi 0, %s230
      %s233 = sphi 0, %s232
      %s247 = sphi 0, %s233
      %s251 = sphi 0, %s251
      %s253 = sphi 0, %s251
      %s254 = sphi 0, %s253
      %s268 = sphi 0, %s254
      %s272 = sphi 0, %s272
      %s274 = sphi 0, %s272
      %s275 = sphi 0, %s274
      %s289 = sphi 0, %s275
      %s293 = sphi 0, %s293
      %s295 = sphi 0, %s293
      %s296 = sphi 0, %s295
      %s310 = sphi 0, %s296
      %s314 = sphi 0, %s314
      %s316 = sphi 0, %s314
      %s317 = sphi 0, %s316
      %s331 = sphi 0, %s317
      %s335 = sphi 0, %s335
      %s337 = sphi 0, %s335
      %s338 = sphi 0, %s337
      %s352 = sphi 0, %s338
      %s360 = sphi 0, %s362
      %s363 = sphi 0, %s360
      %s364 = sphi 0, %s363
      %s380 = sphi 0, %s364
    $region4: #{tpu_custom_call.1} parent=1 // loop_header_branch
      %33 = sbr.rel (%p31) target = $region8
    $region5: #{tpu_custom_call.1} parent=1 // loop_body
      %s35 = ssub.s32 %s30, 1
      %s36 = ssub.s32 %s30, 2
      %s43 = sadd.s32 1, %s38
      %p44 = scmp.ge.s32.totalorder %s43, 2
      %s45 = scalar_select %p44, 0, %s43
      %s46 = sadd.s32 1, %s37
      %s47 = scalar_select %p44, %s46, %s37
      %p48 = scmp.ge.s32.totalorder %s47, 2
      %s49 = scalar_select %p48, 0, %s47
      %s50 = ssub.s32 %s37, %s49
      %s51 = ssub.s32 %s38, %s45
      %s52 = sor.u32 %s50, %s51
      %p53 = scmp.eq.s32.totalorder %s52, 0
      %s55 = sadd.s32 %s54, 1
      %s56 = scalar_select %p53, %s54, %s55
      %p59 = pneg %p53
      %p60 = scmp.eq.s32.totalorder %s30, 3
      %p61 = por %p59, %p60
      %p62 = scmp.ne.s32.totalorder %s54, %s57
      %p63 = scmp.eq.s32.totalorder %s30, 0
      %p64 = por %p62, %p63
      %p65 = scmp.ne.s32.totalorder %s54, %s57
      %p66 = scmp.eq.s32.totalorder %s35, 3
      %p67 = por %p65, %p66
      %p68 = scmp.ne.s32.totalorder %s57, %s58
      %p69 = scmp.eq.s32.totalorder %s35, 0
      %p70 = por %p68, %p69
      %p71 = scmp.ne.s32.totalorder %s57, %s58
      %p72 = scmp.eq.s32.totalorder %s36, 3
      %p73 = por %p71, %p72
      %p75 = scmp.ne.s32.totalorder %s58, %s74
      %p76 = scmp.eq.s32.totalorder %s36, 0
      %p77 = por %p75, %p76
      %s78 = ssub.s32 %s38, 1
      %p79 = scmp.gt.s32.totalorder %s78, 0
      %s80 = scalar_select %p79, %s78, 0
      %s81 = ssub.s32 %s45, 1
      %p82 = scmp.gt.s32.totalorder %s81, 0
      %s83 = scalar_select %p82, %s81, 0
      %s84 = ssub.s32 %s37, %s49
      %s85 = ssub.s32 %s80, %s83
      %s86 = sor.u32 %s84, %s85
      %p87 = scmp.eq.s32.totalorder %s86, 0
      %s89 = sadd.s32 %s88, 1
      %s90 = scalar_select %p87, %s88, %s89
      %p93 = pneg %p87
      %p94 = scmp.eq.s32.totalorder %s30, 3
      %p95 = por %p93, %p94
      %p96 = scmp.ne.s32.totalorder %s88, %s91
      %p97 = scmp.eq.s32.totalorder %s30, 0
      %p98 = por %p96, %p97
      %p99 = scmp.ne.s32.totalorder %s88, %s91
      %p100 = scmp.eq.s32.totalorder %s35, 3
      %p101 = por %p99, %p100
      %p102 = scmp.ne.s32.totalorder %s91, %s92
      %p103 = scmp.eq.s32.totalorder %s35, 0
      %p104 = por %p102, %p103
      %p105 = scmp.ne.s32.totalorder %s91, %s92
      %p106 = scmp.eq.s32.totalorder %s36, 3
      %p107 = por %p105, %p106
      %p109 = scmp.ne.s32.totalorder %s92, %s108
      %p110 = scmp.eq.s32.totalorder %s36, 0
      %p111 = por %p109, %p110
      %s112 = sadd.s32 %s38, 1
      %p113 = scmp.lt.s32.totalorder %s112, 1
      %s114 = scalar_select %p113, %s112, 1
      %s115 = sadd.s32 %s45, 1
      %p116 = scmp.lt.s32.totalorder %s115, 1
      %s117 = scalar_select %p116, %s115, 1
      %s118 = ssub.s32 %s37, %s49
      %s119 = ssub.s32 %s114, %s117
      %s120 = sor.u32 %s118, %s119
      %p121 = scmp.eq.s32.totalorder %s120, 0
      %s123 = sadd.s32 %s122, 1
      %s124 = scalar_select %p121, %s122, %s123
      %p127 = pneg %p121
      %p128 = scmp.eq.s32.totalorder %s30, 3
      %p129 = por %p127, %p128
      %p130 = scmp.ne.s32.totalorder %s122, %s125
      %p131 = scmp.eq.s32.totalorder %s30, 0
      %p132 = por %p130, %p131
      %p133 = scmp.ne.s32.totalorder %s122, %s125
      %p134 = scmp.eq.s32.totalorder %s35, 3
      %p135 = por %p133, %p134
      %p136 = scmp.ne.s32.totalorder %s125, %s126
      %p137 = scmp.eq.s32.totalorder %s35, 0
      %p138 = por %p136, %p137
      %p139 = scmp.ne.s32.totalorder %s125, %s126
      %p140 = scmp.eq.s32.totalorder %s36, 3
      %p141 = por %p139, %p140
      %p143 = scmp.ne.s32.totalorder %s126, %s142
      %p144 = scmp.eq.s32.totalorder %s36, 0
      %p145 = por %p143, %p144
      %s147 = sadd.s32 %s146, 1
      %p150 = scmp.eq.s32.totalorder %s30, 3
      %p151 = scmp.ne.s32.totalorder %s146, %s148
      %p152 = scmp.eq.s32.totalorder %s30, 0
      %p153 = por %p151, %p152
      %p154 = scmp.ne.s32.totalorder %s146, %s148
      %p155 = scmp.eq.s32.totalorder %s35, 3
      %p156 = por %p154, %p155
      %p157 = scmp.ne.s32.totalorder %s148, %s149
      %p158 = scmp.eq.s32.totalorder %s35, 0
      %p159 = por %p157, %p158
      %p160 = scmp.ne.s32.totalorder %s148, %s149
      %p161 = scmp.eq.s32.totalorder %s36, 3
      %p162 = por %p160, %p161
      %p164 = scmp.ne.s32.totalorder %s149, %s163
      %p165 = scmp.eq.s32.totalorder %s36, 0
      %p166 = por %p164, %p165
      %s168 = sadd.s32 %s167, 1
      %p171 = scmp.eq.s32.totalorder %s30, 3
      %p172 = scmp.ne.s32.totalorder %s167, %s169
      %p173 = scmp.eq.s32.totalorder %s30, 0
      %p174 = por %p172, %p173
      %p175 = scmp.ne.s32.totalorder %s167, %s169
      %p176 = scmp.eq.s32.totalorder %s35, 3
      %p177 = por %p175, %p176
      %p178 = scmp.ne.s32.totalorder %s169, %s170
      %p179 = scmp.eq.s32.totalorder %s35, 0
      %p180 = por %p178, %p179
      %p181 = scmp.ne.s32.totalorder %s169, %s170
      %p182 = scmp.eq.s32.totalorder %s36, 3
      %p183 = por %p181, %p182
      %p185 = scmp.ne.s32.totalorder %s170, %s184
      %p186 = scmp.eq.s32.totalorder %s36, 0
      %p187 = por %p185, %p186
      %s189 = sadd.s32 %s188, 1
      %p192 = scmp.eq.s32.totalorder %s30, 3
      %p193 = scmp.ne.s32.totalorder %s188, %s190
      %p194 = scmp.eq.s32.totalorder %s30, 0
      %p195 = por %p193, %p194
      %p196 = scmp.ne.s32.totalorder %s188, %s190
      %p197 = scmp.eq.s32.totalorder %s35, 3
      %p198 = por %p196, %p197
      %p199 = scmp.ne.s32.totalorder %s190, %s191
      %p200 = scmp.eq.s32.totalorder %s35, 0
      %p201 = por %p199, %p200
      %p202 = scmp.ne.s32.totalorder %s190, %s191
      %p203 = scmp.eq.s32.totalorder %s36, 3
      %p204 = por %p202, %p203
      %p206 = scmp.ne.s32.totalorder %s191, %s205
      %p207 = scmp.eq.s32.totalorder %s36, 0
      %p208 = por %p206, %p207
      %s210 = sadd.s32 %s209, 1
      %p213 = scmp.eq.s32.totalorder %s30, 3
      %p214 = scmp.ne.s32.totalorder %s209, %s211
      %p215 = scmp.eq.s32.totalorder %s30, 0
      %p216 = por %p214, %p215
      %p217 = scmp.ne.s32.totalorder %s209, %s211
      %p218 = scmp.eq.s32.totalorder %s35, 3
      %p219 = por %p217, %p218
      %p220 = scmp.ne.s32.totalorder %s211, %s212
      %p221 = scmp.eq.s32.totalorder %s35, 0
      %p222 = por %p220, %p221
      %p223 = scmp.ne.s32.totalorder %s211, %s212
      %p224 = scmp.eq.s32.totalorder %s36, 3
      %p225 = por %p223, %p224
      %p227 = scmp.ne.s32.totalorder %s212, %s226
      %p228 = scmp.eq.s32.totalorder %s36, 0
      %p229 = por %p227, %p228
      %s231 = sadd.s32 %s230, 1
      %p234 = scmp.eq.s32.totalorder %s30, 3
      %p235 = scmp.ne.s32.totalorder %s230, %s232
      %p236 = scmp.eq.s32.totalorder %s30, 0
      %p237 = por %p235, %p236
      %p238 = scmp.ne.s32.totalorder %s230, %s232
      %p239 = scmp.eq.s32.totalorder %s35, 3
      %p240 = por %p238, %p239
      %p241 = scmp.ne.s32.totalorder %s232, %s233
      %p242 = scmp.eq.s32.totalorder %s35, 0
      %p243 = por %p241, %p242
      %p244 = scmp.ne.s32.totalorder %s232, %s233
      %p245 = scmp.eq.s32.totalorder %s36, 3
      %p246 = por %p244, %p245
      %p248 = scmp.ne.s32.totalorder %s233, %s247
      %p249 = scmp.eq.s32.totalorder %s36, 0
      %p250 = por %p248, %p249
      %s252 = sadd.s32 %s251, 1
      %p255 = scmp.eq.s32.totalorder %s30, 3
      %p256 = scmp.ne.s32.totalorder %s251, %s253
      %p257 = scmp.eq.s32.totalorder %s30, 0
      %p258 = por %p256, %p257
      %p259 = scmp.ne.s32.totalorder %s251, %s253
      %p260 = scmp.eq.s32.totalorder %s35, 3
      %p261 = por %p259, %p260
      %p262 = scmp.ne.s32.totalorder %s253, %s254
      %p263 = scmp.eq.s32.totalorder %s35, 0
      %p264 = por %p262, %p263
      %p265 = scmp.ne.s32.totalorder %s253, %s254
      %p266 = scmp.eq.s32.totalorder %s36, 3
      %p267 = por %p265, %p266
      %p269 = scmp.ne.s32.totalorder %s254, %s268
      %p270 = scmp.eq.s32.totalorder %s36, 0
      %p271 = por %p269, %p270
      %s273 = sadd.s32 %s272, 1
      %p276 = scmp.eq.s32.totalorder %s30, 3
      %p277 = scmp.ne.s32.totalorder %s272, %s274
      %p278 = scmp.eq.s32.totalorder %s30, 0
      %p279 = por %p277, %p278
      %p280 = scmp.ne.s32.totalorder %s272, %s274
      %p281 = scmp.eq.s32.totalorder %s35, 3
      %p282 = por %p280, %p281
      %p283 = scmp.ne.s32.totalorder %s274, %s275
      %p284 = scmp.eq.s32.totalorder %s35, 0
      %p285 = por %p283, %p284
      %p286 = scmp.ne.s32.totalorder %s274, %s275
      %p287 = scmp.eq.s32.totalorder %s36, 3
      %p288 = por %p286, %p287
      %p290 = scmp.ne.s32.totalorder %s275, %s289
      %p291 = scmp.eq.s32.totalorder %s36, 0
      %p292 = por %p290, %p291
      %s294 = sadd.s32 %s293, 1
      %p297 = scmp.eq.s32.totalorder %s30, 3
      %p298 = scmp.ne.s32.totalorder %s293, %s295
      %p299 = scmp.eq.s32.totalorder %s30, 0
      %p300 = por %p298, %p299
      %p301 = scmp.ne.s32.totalorder %s293, %s295
      %p302 = scmp.eq.s32.totalorder %s35, 3
      %p303 = por %p301, %p302
      %p304 = scmp.ne.s32.totalorder %s295, %s296
      %p305 = scmp.eq.s32.totalorder %s35, 0
      %p306 = por %p304, %p305
      %p307 = scmp.ne.s32.totalorder %s295, %s296
      %p308 = scmp.eq.s32.totalorder %s36, 3
      %p309 = por %p307, %p308
      %p311 = scmp.ne.s32.totalorder %s296, %s310
      %p312 = scmp.eq.s32.totalorder %s36, 0
      %p313 = por %p311, %p312
      %s315 = sadd.s32 %s314, 1
      %p318 = scmp.eq.s32.totalorder %s30, 3
      %p319 = scmp.ne.s32.totalorder %s314, %s316
      %p320 = scmp.eq.s32.totalorder %s30, 0
      %p321 = por %p319, %p320
      %p322 = scmp.ne.s32.totalorder %s314, %s316
      %p323 = scmp.eq.s32.totalorder %s35, 3
      %p324 = por %p322, %p323
      %p325 = scmp.ne.s32.totalorder %s316, %s317
      %p326 = scmp.eq.s32.totalorder %s35, 0
      %p327 = por %p325, %p326
      %p328 = scmp.ne.s32.totalorder %s316, %s317
      %p329 = scmp.eq.s32.totalorder %s36, 3
      %p330 = por %p328, %p329
      %p332 = scmp.ne.s32.totalorder %s317, %s331
      %p333 = scmp.eq.s32.totalorder %s36, 0
      %p334 = por %p332, %p333
      %s336 = sadd.s32 %s335, 1
      %p339 = scmp.eq.s32.totalorder %s30, 3
      %p340 = scmp.ne.s32.totalorder %s335, %s337
      %p341 = scmp.eq.s32.totalorder %s30, 0
      %p342 = por %p340, %p341
      %p343 = scmp.ne.s32.totalorder %s335, %s337
      %p344 = scmp.eq.s32.totalorder %s35, 3
      %p345 = por %p343, %p344
      %p346 = scmp.ne.s32.totalorder %s337, %s338
      %p347 = scmp.eq.s32.totalorder %s35, 0
      %p348 = por %p346, %p347
      %p349 = scmp.ne.s32.totalorder %s337, %s338
      %p350 = scmp.eq.s32.totalorder %s36, 3
      %p351 = por %p349, %p350
      %p353 = scmp.ne.s32.totalorder %s338, %s352
      %p354 = scmp.eq.s32.totalorder %s36, 0
      %p355 = por %p353, %p354
      %s356 = ssub.s32 %s37, %s49
      %s357 = ssub.s32 %s38, %s45
      %s358 = sor.u32 %s356, %s357
      %p359 = scmp.eq.s32.totalorder %s358, 0
      %s361 = sadd.s32 %s360, 1
      %s362 = scalar_select %p359, %s360, %s361
      %p365 = pneg %p359
      %p366 = scmp.eq.s32.totalorder %s30, 3
      %p367 = por %p365, %p366
      %p368 = scmp.ne.s32.totalorder %s360, %s363
      %p369 = scmp.eq.s32.totalorder %s30, 0
      %p370 = por %p368, %p369
      %p371 = scmp.ne.s32.totalorder %s360, %s363
      %p372 = scmp.eq.s32.totalorder %s35, 3
      %p373 = por %p371, %p372
      %p374 = scmp.ne.s32.totalorder %s363, %s364
      %p375 = scmp.eq.s32.totalorder %s35, 0
      %p376 = por %p374, %p375
      %p377 = scmp.ne.s32.totalorder %s363, %s364
      %p378 = scmp.eq.s32.totalorder %s36, 3
      %p379 = por %p377, %p378
      %p381 = scmp.ne.s32.totalorder %s364, %s380
      %p382 = scmp.eq.s32.totalorder %s36, 0
      %p383 = por %p381, %p382
      %p384 = scmp.le.s32.totalorder 1, %s30
      %p385 = scmp.lt.s32.totalorder %s30, 5
      %p386 = pnand %p384, %p385
      %p387 = pneg %p386
      // Predicated region
      $region9: #{tpu_custom_call.1} parent=5 // pred_check
        _
      $region10: #{tpu_custom_call.1} parent=5 // pred_check_branch
        %389 = sbr.rel (%p386) target = $region12
      $region11: #{tpu_custom_call.1} parent=5 // pred_region
        %s390 = ssub.s32 %s30, 1
        // Predicated region
        $region13: #{tpu_custom_call.1} parent=11 // pred_check
          %p391 = pneg %p159
        $region14: #{tpu_custom_call.1} parent=11 // pred_check_branch
          %393 = sbr.rel (%p391) target = $region16
        $region15: #{tpu_custom_call.1} parent=11 // pred_region
          _
        $region16: #{tpu_custom_call.1} parent=11 // pred_fallthru
          _
        // Predicated region
        $region17: #{tpu_custom_call.1} parent=11 // pred_check
          %p394 = pneg %p180
        $region18: #{tpu_custom_call.1} parent=11 // pred_check_branch
          %396 = sbr.rel (%p394) target = $region20
        $region19: #{tpu_custom_call.1} parent=11 // pred_region
          _
        $region20: #{tpu_custom_call.1} parent=11 // pred_fallthru
          _
        // Predicated region
        $region21: #{tpu_custom_call.1} parent=11 // pred_check
          %p397 = pneg %p201
        $region22: #{tpu_custom_call.1} parent=11 // pred_check_branch
          %399 = sbr.rel (%p397) target = $region24
        $region23: #{tpu_custom_call.1} parent=11 // pred_region
          %s401 = ssub.s32 3072, 3072
          %402 = vsyncadd [#allocation9], %s401
          %s403 = sshll.u32 [#allocation8], 4
          %s404 = int_to_ptr.vmem [resolvable:$true] %s403
          %409 = dma.hbm_to_vmem [thread:$0]  %s5, 3072, %s404, [#allocation9], 64, 64, 4
        $region24: #{tpu_custom_call.1} parent=11 // pred_fallthru
          _
        // Predicated region
        $region25: #{tpu_custom_call.1} parent=11 // pred_check
          %p410 = pneg %p222
        $region26: #{tpu_custom_call.1} parent=11 // pred_check_branch
          %412 = sbr.rel (%p410) target = $region28
        $region27: #{tpu_custom_call.1} parent=11 // pred_region
          _
        $region28: #{tpu_custom_call.1} parent=11 // pred_fallthru
          _
        // Predicated region
        $region29: #{tpu_custom_call.1} parent=11 // pred_check
          %p413 = pneg %p243
        $region30: #{tpu_custom_call.1} parent=11 // pred_check_branch
          %415 = sbr.rel (%p413) target = $region32
        $region31: #{tpu_custom_call.1} parent=11 // pred_region
          _
        $region32: #{tpu_custom_call.1} parent=11 // pred_fallthru
          _
        // Predicated region
        $region33: #{tpu_custom_call.1} parent=11 // pred_check
          %p416 = pneg %p264
        $region34: #{tpu_custom_call.1} parent=11 // pred_check_branch
          %418 = sbr.rel (%p416) target = $region36
        $region35: #{tpu_custom_call.1} parent=11 // pred_region
          _
        $region36: #{tpu_custom_call.1} parent=11 // pred_fallthru
          _
        // Predicated region
        $region37: #{tpu_custom_call.1} parent=11 // pred_check
          %p419 = pneg %p285
        $region38: #{tpu_custom_call.1} parent=11 // pred_check_branch
          %421 = sbr.rel (%p419) target = $region40
        $region39: #{tpu_custom_call.1} parent=11 // pred_region
          %s423 = ssub.s32 1024, 1024
          %424 = vsyncadd [#allocation9], %s423
          %s425 = sshll.u32 [#allocation10], 4
          %s426 = int_to_ptr.vmem [resolvable:$true] %s425
          %431 = dma.hbm_to_vmem [thread:$0]  %s9, 1024, %s426, [#allocation9], 64, 64, 4
        $region40: #{tpu_custom_call.1} parent=11 // pred_fallthru
          _
        // Predicated region
        $region41: #{tpu_custom_call.1} parent=11 // pred_check
          %p432 = pneg %p306
        $region42: #{tpu_custom_call.1} parent=11 // pred_check_branch
          %434 = sbr.rel (%p432) target = $region44
        $region43: #{tpu_custom_call.1} parent=11 // pred_region
          _
        $region44: #{tpu_custom_call.1} parent=11 // pred_fallthru
          _
        // Predicated region
        $region45: #{tpu_custom_call.1} parent=11 // pred_check
          %p435 = pneg %p327
        $region46: #{tpu_custom_call.1} parent=11 // pred_check_branch
          %437 = sbr.rel (%p435) target = $region48
        $region47: #{tpu_custom_call.1} parent=11 // pred_region
          %s439 = ssub.s32 1024, 1024
          %440 = vsyncadd [#allocation12], %s439
          %s441 = sshll.u32 [#allocation11], 4
          %s442 = int_to_ptr.vmem [resolvable:$true] %s441
          %447 = dma.hbm_to_vmem [thread:$0]  %s11, 1024, %s442, [#allocation12], 64, 64, 4
        $region48: #{tpu_custom_call.1} parent=11 // pred_fallthru
          _
        // Predicated region
        $region49: #{tpu_custom_call.1} parent=11 // pred_check
          %p448 = pneg %p348
        $region50: #{tpu_custom_call.1} parent=11 // pred_check_branch
          %450 = sbr.rel (%p448) target = $region52
        $region51: #{tpu_custom_call.1} parent=11 // pred_region
          _
        $region52: #{tpu_custom_call.1} parent=11 // pred_fallthru
          _
      $region12: #{tpu_custom_call.1} parent=5 // pred_fallthru
        _
      %p451 = scmp.lt.s32.totalorder %s30, 4
      // Predicated region
      $region53: #{tpu_custom_call.1} parent=5 // pred_check
        %p452 = pneg %p451
      $region54: #{tpu_custom_call.1} parent=5 // pred_check_branch
        %454 = sbr.rel (%p452) target = $region56
      $region55: #{tpu_custom_call.1} parent=5 // pred_region
        // Predicated region
        $region57: #{tpu_custom_call.1} parent=55 // pred_check
          %p455 = pneg %p64
        $region58: #{tpu_custom_call.1} parent=55 // pred_check_branch
          %457 = sbr.rel (%p455) target = $region60
        $region59: #{tpu_custom_call.1} parent=55 // pred_region
          %s458 = sand.u32 %s54, 1
          %s459 = scalar_lea.sflag [#allocation3], %s458
          %s460 = sand.u32 %s54, 1
          %s461 = smul.addr %s460, 8
          %s462 = scalar_lea.vmem [#allocation2], %s461
          %s464 = ssub.s32 128, 128
          %465 = vsyncadd %s459, %s464
          %s466 = smul.addr %s37, 2
          %s467 = sadd.s32 %s38, %s466
          %s468 = smul.addr %s467, 128
          %s469 = scalar_lea.hbm %s0, %s468
          %s471 = sshll.u32 %s462, 4
          %s472 = int_to_ptr.vmem [resolvable:$true] %s471
          %474 = dma.hbm_to_vmem [thread:$0]  %s469, 128, %s472, %s459
        $region60: #{tpu_custom_call.1} parent=55 // pred_fallthru
          _
        // Predicated region
        $region61: #{tpu_custom_call.1} parent=55 // pred_check
          %p475 = pneg %p98
        $region62: #{tpu_custom_call.1} parent=55 // pred_check_branch
          %477 = sbr.rel (%p475) target = $region64
        $region63: #{tpu_custom_call.1} parent=55 // pred_region
          %s478 = sand.u32 %s30, 1
          %s479 = scalar_lea.sflag [#allocation6], %s478
          %s480 = sand.u32 %s88, 1
          %s481 = smul.addr %s480, 8
          %s482 = scalar_lea.vmem [#allocation5], %s481
          %s483 = ssub.s32 %s38, 1
          %p484 = scmp.gt.s32.totalorder %s483, 0
          %s485 = scalar_select %p484, %s483, 0
          %s487 = ssub.s32 128, 128
          %488 = vsyncadd %s479, %s487
          %s489 = smul.addr %s37, 2
          %s490 = sadd.s32 %s485, %s489
          %s491 = smul.addr %s490, 128
          %s492 = scalar_lea.hbm %s1, %s491
          %s494 = sshll.u32 %s482, 4
          %s495 = int_to_ptr.vmem [resolvable:$true] %s494
          %497 = dma.hbm_to_vmem [thread:$0]  %s492, 128, %s495, %s479
        $region64: #{tpu_custom_call.1} parent=55 // pred_fallthru
          _
        // Predicated region
        $region65: #{tpu_custom_call.1} parent=55 // pred_check
          %p498 = pneg %p132
        $region66: #{tpu_custom_call.1} parent=55 // pred_check_branch
          %500 = sbr.rel (%p498) target = $region68
        $region67: #{tpu_custom_call.1} parent=55 // pred_region
          %s501 = sand.u32 %s30, 1
          %s502 = scalar_lea.sflag [#allocation6], %s501
          %s503 = sand.u32 %s122, 1
          %s504 = smul.addr %s503, 8
          %s505 = scalar_lea.vmem [#allocation7], %s504
          %s506 = sadd.s32 %s38, 1
          %p507 = scmp.lt.s32.totalorder %s506, 1
          %s508 = scalar_select %p507, %s506, 1
          %s510 = ssub.s32 128, 128
          %511 = vsyncadd %s502, %s510
          %s512 = smul.addr %s37, 2
          %s513 = sadd.s32 %s508, %s512
          %s514 = smul.addr %s513, 128
          %s515 = scalar_lea.hbm %s2, %s514
          %s517 = sshll.u32 %s505, 4
          %s518 = int_to_ptr.vmem [resolvable:$true] %s517
          %520 = dma.hbm_to_vmem [thread:$0]  %s515, 128, %s518, %s502
        $region68: #{tpu_custom_call.1} parent=55 // pred_fallthru
          _
      $region56: #{tpu_custom_call.1} parent=5 // pred_fallthru
        _
      %p521 = scmp.le.s32.totalorder 1, %s30
      %p522 = scmp.lt.s32.totalorder %s30, 5
      %p523 = pnand %p521, %p522
      %p524 = pneg %p523
      // Predicated region
      $region69: #{tpu_custom_call.1} parent=5 // pred_check
        _
      $region70: #{tpu_custom_call.1} parent=5 // pred_check_branch
        %526 = sbr.rel (%p523) target = $region72
      $region71: #{tpu_custom_call.1} parent=5 // pred_region
        %s527 = ssub.s32 %s30, 1
        %s528 = sand.u32 %s57, 1
        %s529 = scalar_lea.sflag [#allocation3], %s528
        %s530 = sand.u32 %s57, 1
        %s531 = smul.addr %s530, 8
        %s532 = scalar_lea.vmem [#allocation2], %s531
        // Predicated region
        $region73: #{tpu_custom_call.1} parent=71 // pred_check
          %p533 = pneg %p70
        $region74: #{tpu_custom_call.1} parent=71 // pred_check_branch
          %535 = sbr.rel (%p533) target = $region76
        $region75: #{tpu_custom_call.1} parent=71 // pred_region
          %536 = dma.done %s529, 128
        $region76: #{tpu_custom_call.1} parent=71 // pred_fallthru
          _
        %s537 = sand.u32 %s35, 1
        %s538 = scalar_lea.sflag [#allocation6], %s537
        %s539 = sand.u32 %s91, 1
        %s540 = smul.addr %s539, 8
        %s541 = scalar_lea.vmem [#allocation5], %s540
        // Predicated region
        $region77: #{tpu_custom_call.1} parent=71 // pred_check
          %p542 = pneg %p104
        $region78: #{tpu_custom_call.1} parent=71 // pred_check_branch
          %544 = sbr.rel (%p542) target = $region80
        $region79: #{tpu_custom_call.1} parent=71 // pred_region
          %545 = dma.done %s538, 128
        $region80: #{tpu_custom_call.1} parent=71 // pred_fallthru
          _
        %s546 = sand.u32 %s35, 1
        %s547 = scalar_lea.sflag [#allocation6], %s546
        %s548 = sand.u32 %s125, 1
        %s549 = smul.addr %s548, 8
        %s550 = scalar_lea.vmem [#allocation7], %s549
        // Predicated region
        $region81: #{tpu_custom_call.1} parent=71 // pred_check
          %p551 = pneg %p138
        $region82: #{tpu_custom_call.1} parent=71 // pred_check_branch
          %553 = sbr.rel (%p551) target = $region84
        $region83: #{tpu_custom_call.1} parent=71 // pred_region
          %554 = dma.done %s547, 128
        $region84: #{tpu_custom_call.1} parent=71 // pred_fallthru
          _
        // Predicated region
        $region85: #{tpu_custom_call.1} parent=71 // pred_check
          %p555 = pneg %p201
        $region86: #{tpu_custom_call.1} parent=71 // pred_check_branch
          %557 = sbr.rel (%p555) target = $region88
        $region87: #{tpu_custom_call.1} parent=71 // pred_region
          %558 = dma.done [#allocation9], 3072
        $region88: #{tpu_custom_call.1} parent=71 // pred_fallthru
          _
        // Predicated region
        $region89: #{tpu_custom_call.1} parent=71 // pred_check
          %p559 = pneg %p285
        $region90: #{tpu_custom_call.1} parent=71 // pred_check_branch
          %561 = sbr.rel (%p559) target = $region92
        $region91: #{tpu_custom_call.1} parent=71 // pred_region
          %562 = dma.done [#allocation9], 1024
        $region92: #{tpu_custom_call.1} parent=71 // pred_fallthru
          _
        // Predicated region
        $region93: #{tpu_custom_call.1} parent=71 // pred_check
          %p563 = pneg %p327
        $region94: #{tpu_custom_call.1} parent=71 // pred_check_branch
          %565 = sbr.rel (%p563) target = $region96
        $region95: #{tpu_custom_call.1} parent=71 // pred_region
          %566 = dma.done [#allocation12], 1024
        $region96: #{tpu_custom_call.1} parent=71 // pred_fallthru
          _
        %s567 = sand.u32 %s57, 1
        %s568 = scalar_lea.sflag [#allocation3], %s567
        %s569 = sand.u32 %s57, 1
        %s570 = smul.addr %s569, 8
        %s571 = scalar_lea.vmem [#allocation2], %s570
        %p572 = pneg %p70
        %p573 = pneg %p67
        %s574 = sand.u32 %s35, 1
        %s575 = scalar_lea.sflag [#allocation6], %s574
        %s576 = sand.u32 %s91, 1
        %s577 = smul.addr %s576, 8
        %s578 = scalar_lea.vmem [#allocation5], %s577
        %p579 = pneg %p104
        %p580 = pneg %p101
        %s581 = sand.u32 %s35, 1
        %s582 = scalar_lea.sflag [#allocation6], %s581
        %s583 = sand.u32 %s125, 1
        %s584 = smul.addr %s583, 8
        %s585 = scalar_lea.vmem [#allocation7], %s584
        %p586 = pneg %p138
        %p587 = pneg %p135
        %p588 = pneg %p159
        %p589 = pneg %p156
        %p590 = pneg %p180
        %p591 = pneg %p177
        %p592 = pneg %p201
        %p593 = pneg %p198
        %p594 = pneg %p222
        %p595 = pneg %p219
        %p596 = pneg %p243
        %p597 = pneg %p240
        %p598 = pneg %p264
        %p599 = pneg %p261
        %p600 = pneg %p285
        %p601 = pneg %p282
        %p602 = pneg %p306
        %p603 = pneg %p303
        %p604 = pneg %p327
        %p605 = pneg %p324
        %p606 = pneg %p348
        %p607 = pneg %p345
        %p608 = pneg %p376
        %p609 = pneg %p373
        %s610 = sand.u32 %s363, 1
        %s611 = scalar_lea.sflag [#allocation4], %s610
        %s612 = sand.u32 %s363, 1
        %s613 = smul.addr %s612, 8
        %s614 = scalar_lea.vmem [#allocation13], %s613
        %s615 = ssub.s32 %s40, 1
        %p616 = scmp.gt.s32.totalorder %s615, 0
        %s617 = scalar_select %p616, %s615, 0
        %s618 = sadd.s32 %s40, 1
        %p619 = scmp.lt.s32.totalorder %s618, 1
        %s620 = scalar_select %p619, %s618, 1
        %v622 = vld [vmem:[%s532] sm:$0xff]
        %v623 = vld [vmem:[%s3] sm:$0x1]
        %v624 = vld [vmem:[%s4] sm:$0x1]
        %v626 = vlaneseq
        %v627 = vshrl.u32 %v626, 7
        %v628 = vsub.s32 0, %v627
        %v629 = vrot.slane %v623, %v628
        %v631 = vmul.f32 %v622, %v629
        %v632 = vand.u32 2147483647, %v631
        %vm633 = vcmp.le.f32.partialorder %v632, 0.7853982
        %vm634 = vcmp.lt.s32.totalorder %v631, 0
        %v635 = vand.u32 %v631, 2139095040
        %v636 = vshrl.u32 %v635, 23
        %v637 = vsub.s32 %v636, 127
        %v638 = vand.u32 2147483647, %v631
        %v639 = vand.u32 %v638, 8388607
        %v640 = vor.u32 %v639, 8388608
        %v641 = vsub.s32 0, %v640
        %v642 = vadd.s32 %v637, 1
        %vm643 = vcmp.gt.s32.totalorder %v642, 0
        %v644 = vsel %vm643, %v642, 0
        %v645 = vshrl.u32 %v644, 5
        %v646 = vand.u32 %v644, 31
        %v647 = vsub.s32 32, %v646
        %v648 = vshrl.u32 683565275, %v647
        %v649 = vshll.u32 683565275, %v646
        %v650 = vshrl.u32 2475754826, %v647
        %v651 = vor.u32 %v649, %v650
        %v652 = vshll.u32 2475754826, %v646
        %v653 = vshrl.u32 2131351028, %v647
        %v654 = vor.u32 %v652, %v653
        %v655 = vshll.u32 2131351028, %v646
        %v656 = vshrl.u32 2102212464, %v647
        %v657 = vor.u32 %v655, %v656
        %v658 = vshll.u32 2102212464, %v646
        %v659 = vshrl.u32 920167782, %v647
        %v660 = vor.u32 %v658, %v659
        %v661 = vshll.u32 920167782, %v646
        %v662 = vshrl.u32 1326507024, %v647
        %v663 = vor.u32 %v661, %v662
        %vm664 = vcmp.lt.s32.totalorder %v645, 1
        %vm665 = vcmp.lt.s32.totalorder %v645, 2
        %vm666 = vcmp.lt.s32.totalorder %v645, 3
        %vm667 = vcmp.lt.s32.totalorder %v645, 4
        %v668 = vsel %vm664, %v648, %v651
        %v669 = vsel %vm667, %v657, 2102212464
        %v670 = vsel %vm666, %v654, %v669
        %v671 = vsel %vm665, %v668, %v670
        %v672 = vsel %vm664, %v651, %v654
        %v673 = vsel %vm667, %v660, 920167782
        %v674 = vsel %vm666, %v657, %v673
        %v675 = vsel %vm665, %v672, %v674
        %v676 = vsel %vm664, %v654, %v657
        %v677 = vsel %vm667, %v663, 1326507024
        %v678 = vsel %vm666, %v660, %v677
        %v679 = vsel %vm665, %v676, %v678
        %v680 = vshll.u32 %v640, 8
        %v681 = vmul.u32.u64.compose %v680, %v679
        %v682 = vextract.low.u32 %v681
        %v683 = vextract.high.u32 %v681
        %v684 = vmul.u32.u64.compose %v680, %v675
        %v685 = vextract.low.u32 %v684
        %v686 = vextract.high.u32 %v684
        %v687 = vmul.u32 %v680, %v671
        %v688 = vadd.s32 %v683, %v685
        %vm689 = vc.u32 %v683, %v685
        %v690 = vadd.s32 %v686, 1
        %v691 = vsel %vm689, %v690, %v686
        %v692 = vadd.s32 %v687, %v691
        %v693 = vadd.s32 %v692, 536870912
        %v694 = vshrl.u32 %v693, 30
        %v695 = vshll.u32 %v694, 30
        %v696 = vsub.s32 %v692, %v695
        %vm697 = vcmp.lt.s32.totalorder %v696, 0
        %v698 = vsub.s32 0, %v696
        %v699 = vsel %vm697, %v698, %v696
        %v700 = vclz %v699
        %v701 = vsub.s32 %v700, 2
        %vm702 = vcmp.gt.s32.totalorder 0, %v701
        %v703 = vsel %vm702, 0, %v701
        %v704 = vsub.s32 32, %v703
        %v705 = vshll.u32 %v696, %v703
        %v706 = vshrl.u32 %v688, %v704
        %v707 = vor.u32 %v705, %v706
        %v708 = vsub.s32 4294967266, %v703
        %v709 = vadd.s32 %v708, 127
        %v710 = vshll.u32 %v709, 23
        %v711 = vor.u32 4788187, %v710
        %v712 = vand.u32 2147483647, %v711
        %v714 = vcvt.s32.f32 %v707
        %v715 = vmul.f32 %v714, %v712
        %v716 = vxor.u32 %v715, 2147483648
        %v717 = vsel %vm634, %v716, %v715
        %v718 = vsub.s32 4, %v694
        %v719 = vsel %vm634, %v718, %v694
        %v720 = vsel %vm633, %v631, %v717
        %v721 = vsel %vm633, 0, %v719
        %v722 = vcosq.f32.pop %v720
        %v723 = vsinq.f32.pop %v720
        %vm724 = vweird.f32 %v631
        %v725 = vadd.s32 %v721, 3
        %v726 = vand.u32 %v725, 3
        %vm727 = vcmp.lt.s32.totalorder %v726, 2
        %vm728 = vcmp.eq.s32.totalorder %v726, 0
        %v729 = vxor.u32 %v723, 2147483648
        %v730 = vsel %vm728, %v722, %v729
        %vm731 = vcmp.eq.s32.totalorder %v726, 2
        %v732 = vxor.u32 %v722, 2147483648
        %v733 = vsel %vm731, %v732, %v723
        %v734 = vsel %vm727, %v730, %v733
        %v735 = vsel %vm724, nan, %v734
        %v737 = vlaneseq
        %v738 = vshrl.u32 %v737, 7
        %v739 = vsub.s32 0, %v738
        %v740 = vrot.slane %v624, %v739
        %v742 = vmul.f32 %v740, %v735
        %v743 = vmul.f32 %v742, %v735
        %v744 = vadd.f32 %v622, %v743
        %v745 = vld [vmem:[%s541] sm:$0xff]
        %v746 = vmul.f32 %v745, %v629
        %v747 = vand.u32 2147483647, %v746
        %vm748 = vcmp.le.f32.partialorder %v747, 0.7853982
        %vm749 = vcmp.lt.s32.totalorder %v746, 0
        %v750 = vand.u32 %v746, 2139095040
        %v751 = vshrl.u32 %v750, 23
        %v752 = vsub.s32 %v751, 127
        %v753 = vand.u32 2147483647, %v746
        %v754 = vand.u32 %v753, 8388607
        %v755 = vor.u32 %v754, 8388608
        %v756 = vsub.s32 0, %v755
        %v757 = vadd.s32 %v752, 1
        %vm758 = vcmp.gt.s32.totalorder %v757, 0
        %v759 = vsel %vm758, %v757, 0
        %v760 = vshrl.u32 %v759, 5
        %v761 = vand.u32 %v759, 31
        %v762 = vsub.s32 32, %v761
        %v763 = vshrl.u32 683565275, %v762
        %v764 = vshll.u32 683565275, %v761
        %v765 = vshrl.u32 2475754826, %v762
        %v766 = vor.u32 %v764, %v765
        %v767 = vshll.u32 2475754826, %v761
        %v768 = vshrl.u32 2131351028, %v762
        %v769 = vor.u32 %v767, %v768
        %v770 = vshll.u32 2131351028, %v761
        %v771 = vshrl.u32 2102212464, %v762
        %v772 = vor.u32 %v770, %v771
        %v773 = vshll.u32 2102212464, %v761
        %v774 = vshrl.u32 920167782, %v762
        %v775 = vor.u32 %v773, %v774
        %v776 = vshll.u32 920167782, %v761
        %v777 = vshrl.u32 1326507024, %v762
        %v778 = vor.u32 %v776, %v777
        %vm779 = vcmp.lt.s32.totalorder %v760, 1
        %vm780 = vcmp.lt.s32.totalorder %v760, 2
        %vm781 = vcmp.lt.s32.totalorder %v760, 3
        %vm782 = vcmp.lt.s32.totalorder %v760, 4
        %v783 = vsel %vm779, %v763, %v766
        %v784 = vsel %vm782, %v772, 2102212464
        %v785 = vsel %vm781, %v769, %v784
        %v786 = vsel %vm780, %v783, %v785
        %v787 = vsel %vm779, %v766, %v769
        %v788 = vsel %vm782, %v775, 920167782
        %v789 = vsel %vm781, %v772, %v788
        %v790 = vsel %vm780, %v787, %v789
        %v791 = vsel %vm779, %v769, %v772
        %v792 = vsel %vm782, %v778, 1326507024
        %v793 = vsel %vm781, %v775, %v792
        %v794 = vsel %vm780, %v791, %v793
        %v795 = vshll.u32 %v755, 8
        %v796 = vmul.u32.u64.compose %v795, %v794
        %v797 = vextract.low.u32 %v796
        %v798 = vextract.high.u32 %v796
        %v799 = vmul.u32.u64.compose %v795, %v790
        %v800 = vextract.low.u32 %v799
        %v801 = vextract.high.u32 %v799
        %v802 = vmul.u32 %v795, %v786
        %v803 = vadd.s32 %v798, %v800
        %vm804 = vc.u32 %v798, %v800
        %v805 = vadd.s32 %v801, 1
        %v806 = vsel %vm804, %v805, %v801
        %v807 = vadd.s32 %v802, %v806
        %v808 = vadd.s32 %v807, 536870912
        %v809 = vshrl.u32 %v808, 30
        %v810 = vshll.u32 %v809, 30
        %v811 = vsub.s32 %v807, %v810
        %vm812 = vcmp.lt.s32.totalorder %v811, 0
        %v813 = vsub.s32 0, %v811
        %v814 = vsel %vm812, %v813, %v811
        %v815 = vclz %v814
        %v816 = vsub.s32 %v815, 2
        %vm817 = vcmp.gt.s32.totalorder 0, %v816
        %v818 = vsel %vm817, 0, %v816
        %v819 = vsub.s32 32, %v818
        %v820 = vshll.u32 %v811, %v818
        %v821 = vshrl.u32 %v803, %v819
        %v822 = vor.u32 %v820, %v821
        %v823 = vsub.s32 4294967266, %v818
        %v824 = vadd.s32 %v823, 127
        %v825 = vshll.u32 %v824, 23
        %v826 = vor.u32 4788187, %v825
        %v827 = vand.u32 2147483647, %v826
        %v829 = vcvt.s32.f32 %v822
        %v830 = vmul.f32 %v829, %v827
        %v831 = vxor.u32 %v830, 2147483648
        %v832 = vsel %vm749, %v831, %v830
        %v833 = vsub.s32 4, %v809
        %v834 = vsel %vm749, %v833, %v809
        %v835 = vsel %vm748, %v746, %v832
        %v836 = vsel %vm748, 0, %v834
        %v837 = vcosq.f32.pop %v835
        %v838 = vsinq.f32.pop %v835
        %vm839 = vweird.f32 %v746
        %v840 = vadd.s32 %v836, 3
        %v841 = vand.u32 %v840, 3
        %vm842 = vcmp.lt.s32.totalorder %v841, 2
        %vm843 = vcmp.eq.s32.totalorder %v841, 0
        %v844 = vxor.u32 %v838, 2147483648
        %v845 = vsel %vm843, %v837, %v844
        %vm846 = vcmp.eq.s32.totalorder %v841, 2
        %v847 = vxor.u32 %v837, 2147483648
        %v848 = vsel %vm846, %v847, %v838
        %v849 = vsel %vm842, %v845, %v848
        %v850 = vsel %vm839, nan, %v849
        %v852 = vcombine.high %v850, %v850
        %v854 = vunpack.c.l.s4 1966171168
        %v855 = vunpack.c.0.s8 %v854
        %v856 = vlaneseq
        %v857 = vshrl.u32 %v856, 7
        %v858 = vsub.s32 %v855, %v857
        %v859 = vrot.slane %v852, %v858
        %v860 = vcombine.high %v859, %v859
        %v862 = vunpack.c.l.s4 1966171168
        %v863 = vunpack.c.0.s8 %v862
        %v864 = vlaneseq
        %v865 = vshrl.u32 %v864, 7
        %v866 = vsub.s32 %v863, %v865
        %v867 = vrot.slane %v860, %v866
        %v868 = vcombine.high %v867, %v867
        %v870 = vmul.f32 %v624, %v868
        %v871 = vmul.f32 %v870, %v868
        %v873 = vlaneseq
        %v874 = vshrl.u32 %v873, 7
        %v875 = vsub.s32 0, %v874
        %v876 = vrot.slane %v871, %v875
        %v878 = vadd.f32 %v745, %v876
        %v879 = vld [vmem:[%s550] sm:$0xff]
        %v880 = vmul.f32 %v879, %v623
        %v881 = vand.u32 2147483647, %v880
        %vm882 = vcmp.le.f32.partialorder %v881, 0.7853982
        %vm883 = vcmp.lt.s32.totalorder %v880, 0
        %v884 = vand.u32 %v880, 2139095040
        %v885 = vshrl.u32 %v884, 23
        %v886 = vsub.s32 %v885, 127
        %v887 = vand.u32 2147483647, %v880
        %v888 = vand.u32 %v887, 8388607
        %v889 = vor.u32 %v888, 8388608
        %v890 = vsub.s32 0, %v889
        %v891 = vadd.s32 %v886, 1
        %vm892 = vcmp.gt.s32.totalorder %v891, 0
        %v893 = vsel %vm892, %v891, 0
        %v894 = vshrl.u32 %v893, 5
        %v895 = vand.u32 %v893, 31
        %v896 = vsub.s32 32, %v895
        %v897 = vshrl.u32 683565275, %v896
        %v898 = vshll.u32 683565275, %v895
        %v899 = vshrl.u32 2475754826, %v896
        %v900 = vor.u32 %v898, %v899
        %v901 = vshll.u32 2475754826, %v895
        %v902 = vshrl.u32 2131351028, %v896
        %v903 = vor.u32 %v901, %v902
        %v904 = vshll.u32 2131351028, %v895
        %v905 = vshrl.u32 2102212464, %v896
        %v906 = vor.u32 %v904, %v905
        %v907 = vshll.u32 2102212464, %v895
        %v908 = vshrl.u32 920167782, %v896
        %v909 = vor.u32 %v907, %v908
        %v910 = vshll.u32 920167782, %v895
        %v911 = vshrl.u32 1326507024, %v896
        %v912 = vor.u32 %v910, %v911
        %vm913 = vcmp.lt.s32.totalorder %v894, 1
        %vm914 = vcmp.lt.s32.totalorder %v894, 2
        %vm915 = vcmp.lt.s32.totalorder %v894, 3
        %vm916 = vcmp.lt.s32.totalorder %v894, 4
        %v917 = vsel %vm913, %v897, %v900
        %v918 = vsel %vm916, %v906, 2102212464
        %v919 = vsel %vm915, %v903, %v918
        %v920 = vsel %vm914, %v917, %v919
        %v921 = vsel %vm913, %v900, %v903
        %v922 = vsel %vm916, %v909, 920167782
        %v923 = vsel %vm915, %v906, %v922
        %v924 = vsel %vm914, %v921, %v923
        %v925 = vsel %vm913, %v903, %v906
        %v926 = vsel %vm916, %v912, 1326507024
        %v927 = vsel %vm915, %v909, %v926
        %v928 = vsel %vm914, %v925, %v927
        %v929 = vshll.u32 %v889, 8
        %v930 = vmul.u32.u64.compose %v929, %v928
        %v931 = vextract.low.u32 %v930
        %v932 = vextract.high.u32 %v930
        %v933 = vmul.u32.u64.compose %v929, %v924
        %v934 = vextract.low.u32 %v933
        %v935 = vextract.high.u32 %v933
        %v936 = vmul.u32 %v929, %v920
        %v937 = vadd.s32 %v932, %v934
        %vm938 = vc.u32 %v932, %v934
        %v939 = vadd.s32 %v935, 1
        %v940 = vsel %vm938, %v939, %v935
        %v941 = vadd.s32 %v936, %v940
        %v942 = vadd.s32 %v941, 536870912
        %v943 = vshrl.u32 %v942, 30
        %v944 = vshll.u32 %v943, 30
        %v945 = vsub.s32 %v941, %v944
        %vm946 = vcmp.lt.s32.totalorder %v945, 0
        %v947 = vsub.s32 0, %v945
        %v948 = vsel %vm946, %v947, %v945
        %v949 = vclz %v948
        %v950 = vsub.s32 %v949, 2
        %vm951 = vcmp.gt.s32.totalorder 0, %v950
        %v952 = vsel %vm951, 0, %v950
        %v953 = vsub.s32 32, %v952
        %v954 = vshll.u32 %v945, %v952
        %v955 = vshrl.u32 %v937, %v953
        %v956 = vor.u32 %v954, %v955
        %v957 = vsub.s32 4294967266, %v952
        %v958 = vadd.s32 %v957, 127
        %v959 = vshll.u32 %v958, 23
        %v960 = vor.u32 4788187, %v959
        %v961 = vand.u32 2147483647, %v960
        %v963 = vcvt.s32.f32 %v956
        %v964 = vmul.f32 %v963, %v961
        %v965 = vxor.u32 %v964, 2147483648
        %v966 = vsel %vm883, %v965, %v964
        %v967 = vsub.s32 4, %v943
        %v968 = vsel %vm883, %v967, %v943
        %v969 = vsel %vm882, %v880, %v966
        %v970 = vsel %vm882, 0, %v968
        %v971 = vcosq.f32.pop %v969
        %v972 = vsinq.f32.pop %v969
        %vm973 = vweird.f32 %v880
        %v974 = vadd.s32 %v970, 3
        %v975 = vand.u32 %v974, 3
        %vm976 = vcmp.lt.s32.totalorder %v975, 2
        %vm977 = vcmp.eq.s32.totalorder %v975, 0
        %v978 = vxor.u32 %v972, 2147483648
        %v979 = vsel %vm977, %v971, %v978
        %vm980 = vcmp.eq.s32.totalorder %v975, 2
        %v981 = vxor.u32 %v971, 2147483648
        %v982 = vsel %vm980, %v981, %v972
        %v983 = vsel %vm976, %v979, %v982
        %v984 = vsel %vm973, nan, %v983
        %v985 = vmul.f32 %v624, %v984
        %v986 = vmul.f32 %v985, %v984
        %v987 = vadd.f32 %v879, %v986
        %p988 = scmp.eq.s32.totalorder %s40, 0
        %s989 = scalar_select %p988, 1, 0
        %v990 = vstv %s989
        %vm991 = vcmp.eq.s32.totalorder %v990, 1
        %v992 = vsel %vm991, 0.0, %v878
        %p993 = scmp.eq.s32.totalorder %s40, 1
        %s994 = scalar_select %p993, 1, 0
        %v995 = vstv %s994
        %vm996 = vcmp.eq.s32.totalorder %v995, 1
        %v997 = vsel %vm996, 0.0, %v987
        %v999 = vrot.slane %v992, 7
        %v1002 = vrot.slane %v744, 7
        %vm1004 = vcmask 1040384
        %v1005 = vsel %vm1004, %v999, %v1002
        %v1006 = vrot.slane %v744, 1
        %v1009 = vrot.slane %v997, 1
        %vm1011 = vcmask 1046528
        %v1012 = vsel %vm1011, %v1006, %v1009
        %v1013 = vpack.c.bf16 %v1005, %v1005
        %v1014 = vpack.c.bf16 %v744, %v744
        %v1015 = vpack.c.bf16 %v1012, %v1012
        %v1016 = vld [vmem:[#allocation8] sm:$0xf]
        %v1017 = vld [vmem:[#allocation8 + $0x4] sm:$0xf]
        %v1018 = vld [vmem:[#allocation8 + $0x8] sm:$0xf]
        %v1019 = vld [vmem:[#allocation8 + $0xc] sm:$0xf]
        %v1020 = vld [vmem:[#allocation8 + $0x10] sm:$0xf]
        %v1021 = vld [vmem:[#allocation8 + $0x14] sm:$0xf]
        %v1022 = vld [vmem:[#allocation8 + $0x18] sm:$0xf]
        %v1023 = vld [vmem:[#allocation8 + $0x1c] sm:$0xf]
        %v1024 = vld [vmem:[#allocation8 + $0x20] sm:$0xf]
        %v1025 = vld [vmem:[#allocation8 + $0x24] sm:$0xf]
        %v1026 = vld [vmem:[#allocation8 + $0x28] sm:$0xf]
        %v1027 = vld [vmem:[#allocation8 + $0x2c] sm:$0xf]
        %v1028 = vld [vmem:[#allocation8 + $0x30] sm:$0xf]
        %v1029 = vld [vmem:[#allocation8 + $0x34] sm:$0xf]
        %v1030 = vld [vmem:[#allocation8 + $0x38] sm:$0xf]
        %v1031 = vld [vmem:[#allocation8 + $0x3c] sm:$0xf]
        %v1032 = vld [vmem:[#allocation8 + $0x40] sm:$0xf]
        %v1033 = vld [vmem:[#allocation8 + $0x44] sm:$0xf]
        %v1034 = vld [vmem:[#allocation8 + $0x48] sm:$0xf]
        %v1035 = vld [vmem:[#allocation8 + $0x4c] sm:$0xf]
        %v1036 = vld [vmem:[#allocation8 + $0x50] sm:$0xf]
        %v1037 = vld [vmem:[#allocation8 + $0x54] sm:$0xf]
        %v1038 = vld [vmem:[#allocation8 + $0x58] sm:$0xf]
        %v1039 = vld [vmem:[#allocation8 + $0x5c] sm:$0xf]
        %v1040 = vld [vmem:[#allocation8 + $0x60] sm:$0xf]
        %v1041 = vld [vmem:[#allocation8 + $0x64] sm:$0xf]
        %v1042 = vld [vmem:[#allocation8 + $0x68] sm:$0xf]
        %v1043 = vld [vmem:[#allocation8 + $0x6c] sm:$0xf]
        %v1044 = vld [vmem:[#allocation8 + $0x70] sm:$0xf]
        %v1045 = vld [vmem:[#allocation8 + $0x74] sm:$0xf]
        %v1046 = vld [vmem:[#allocation8 + $0x78] sm:$0xf]
        %v1047 = vld [vmem:[#allocation8 + $0x7c] sm:$0xf]
        %v1048 = vld [vmem:[#allocation8 + $0x80] sm:$0xf]
        %v1049 = vld [vmem:[#allocation8 + $0x84] sm:$0xf]
        %v1050 = vld [vmem:[#allocation8 + $0x88] sm:$0xf]
        %v1051 = vld [vmem:[#allocation8 + $0x8c] sm:$0xf]
        %v1052 = vld [vmem:[#allocation8 + $0x90] sm:$0xf]
        %v1053 = vld [vmem:[#allocation8 + $0x94] sm:$0xf]
        %v1054 = vld [vmem:[#allocation8 + $0x98] sm:$0xf]
        %v1055 = vld [vmem:[#allocation8 + $0x9c] sm:$0xf]
        %v1056 = vld [vmem:[#allocation8 + $0xa0] sm:$0xf]
        %v1057 = vld [vmem:[#allocation8 + $0xa4] sm:$0xf]
        %v1058 = vld [vmem:[#allocation8 + $0xa8] sm:$0xf]
        %v1059 = vld [vmem:[#allocation8 + $0xac] sm:$0xf]
        %v1060 = vld [vmem:[#allocation8 + $0xb0] sm:$0xf]
        %v1061 = vld [vmem:[#allocation8 + $0xb4] sm:$0xf]
        %v1062 = vld [vmem:[#allocation8 + $0xb8] sm:$0xf]
        %v1063 = vld [vmem:[#allocation8 + $0xbc] sm:$0xf]
        %v1064 = vld [vmem:[%s6] sm:$0x1]
        %v1066 = vlaneseq
        %v1067 = vshrl.u32 %v1066, 7
        %v1068 = vsub.s32 0, %v1067
        %v1069 = vrot.slane %v1064, %v1068
        %v1119 = vunpack.c.l.b16 %v1016
        %v1120 = vunpack.c.l.b16 %v1017
        %v1121 = vunpack.c.l.b16 %v1018
        %v1122 = vunpack.c.l.b16 %v1019
        %v1123 = vunpack.c.l.b16 %v1020
        %v1124 = vunpack.c.l.b16 %v1021
        %v1125 = vunpack.c.l.b16 %v1022
        %v1126 = vunpack.c.l.b16 %v1023
        %v1127 = vunpack.c.l.b16 %v1024
        %v1128 = vunpack.c.l.b16 %v1025
        %v1129 = vunpack.c.l.b16 %v1026
        %v1130 = vunpack.c.l.b16 %v1027
        %v1131 = vunpack.c.l.b16 %v1028
        %v1132 = vunpack.c.l.b16 %v1029
        %v1133 = vunpack.c.l.b16 %v1030
        %v1134 = vunpack.c.l.b16 %v1031
        %v1135 = vunpack.c.l.b16 %v1032
        %v1136 = vunpack.c.l.b16 %v1033
        %v1137 = vunpack.c.l.b16 %v1034
        %v1138 = vunpack.c.l.b16 %v1035
        %v1139 = vunpack.c.l.b16 %v1036
        %v1140 = vunpack.c.l.b16 %v1037
        %v1141 = vunpack.c.l.b16 %v1038
        %v1142 = vunpack.c.l.b16 %v1039
        %v1143 = vunpack.c.l.b16 %v1040
        %v1144 = vunpack.c.l.b16 %v1041
        %v1145 = vunpack.c.l.b16 %v1042
        %v1146 = vunpack.c.l.b16 %v1043
        %v1147 = vunpack.c.l.b16 %v1044
        %v1148 = vunpack.c.l.b16 %v1045
        %v1149 = vunpack.c.l.b16 %v1046
        %v1150 = vunpack.c.l.b16 %v1047
        %v1151 = vunpack.c.l.b16 %v1048
        %v1152 = vunpack.c.l.b16 %v1049
        %v1153 = vunpack.c.l.b16 %v1050
        %v1154 = vunpack.c.l.b16 %v1051
        %v1155 = vunpack.c.l.b16 %v1052
        %v1156 = vunpack.c.l.b16 %v1053
        %v1157 = vunpack.c.l.b16 %v1054
        %v1158 = vunpack.c.l.b16 %v1055
        %v1159 = vunpack.c.l.b16 %v1056
        %v1160 = vunpack.c.l.b16 %v1057
        %v1161 = vunpack.c.l.b16 %v1058
        %v1162 = vunpack.c.l.b16 %v1059
        %v1163 = vunpack.c.l.b16 %v1060
        %v1164 = vunpack.c.l.b16 %v1061
        %v1165 = vunpack.c.l.b16 %v1062
        %v1166 = vunpack.c.l.b16 %v1063
        %v1167 = vpack.c.b16 %v1120, %v1119
        %v1168 = vpack.c.b16 %v1122, %v1121
        %v1169 = vpack.c.b16 %v1124, %v1123
        %v1170 = vpack.c.b16 %v1126, %v1125
        %v1171 = vpack.c.b16 %v1128, %v1127
        %v1172 = vpack.c.b16 %v1130, %v1129
        %v1173 = vpack.c.b16 %v1132, %v1131
        %v1174 = vpack.c.b16 %v1134, %v1133
        %v1175 = vpack.c.b16 %v1136, %v1135
        %v1176 = vpack.c.b16 %v1138, %v1137
        %v1177 = vpack.c.b16 %v1140, %v1139
        %v1178 = vpack.c.b16 %v1142, %v1141
        %v1179 = vpack.c.b16 %v1144, %v1143
        %v1180 = vpack.c.b16 %v1146, %v1145
        %v1181 = vpack.c.b16 %v1148, %v1147
        %v1182 = vpack.c.b16 %v1150, %v1149
        %v1183 = vpack.c.b16 %v1152, %v1151
        %v1184 = vpack.c.b16 %v1154, %v1153
        %v1185 = vpack.c.b16 %v1156, %v1155
        %v1186 = vpack.c.b16 %v1158, %v1157
        %v1187 = vpack.c.b16 %v1160, %v1159
        %v1188 = vpack.c.b16 %v1162, %v1161
        %v1189 = vpack.c.b16 %v1164, %v1163
        %v1190 = vpack.c.b16 %v1166, %v1165
        %1215 = vmatprep.subr.bf16.mxu0 0
        %1216 = vmatpush1.bf16.msra.mxu0 %v1167
        %1217 = vmatprep.subr.bf16.mxu0 0
        %1218 = vmatpush1.bf16.msra.mxu0 %v1168
        %1219 = vmatprep.subr.bf16.mxu0 0
        %1220 = vmatpush1.bf16.msra.mxu0 %v1169
        %1221 = vmatprep.subr.bf16.mxu0 0
        %1222 = vmatpush1.bf16.msra.mxu0 %v1170
        %1223 = vmatprep.subr.bf16.mxu0 0
        %1224 = vmatpush1.bf16.msra.mxu0 %v1171
        %1225 = vmatprep.subr.bf16.mxu0 0
        %1226 = vmatpush1.bf16.msra.mxu0 %v1172
        %1227 = vmatprep.subr.bf16.mxu0 0
        %1228 = vmatpush1.bf16.msra.mxu0 %v1173
        %1229 = vmatprep.subr.bf16.mxu0 0
        %1230 = vmatpush1.bf16.msra.mxu0 %v1174
        %1231 = vmatprep.subr.bf16.mxu0 0
        %1232 = vmatpush1.bf16.msra.mxu0 %v1175
        %1233 = vmatprep.subr.bf16.mxu0 0
        %1234 = vmatpush1.bf16.msra.mxu0 %v1176
        %1235 = vmatprep.subr.bf16.mxu0 0
        %1236 = vmatpush1.bf16.msra.mxu0 %v1177
        %1237 = vmatprep.subr.bf16.mxu0 0
        %1238 = vmatpush1.bf16.msra.mxu0 %v1178
        %1239 = vmatprep.subr.bf16.mxu0 0
        %1240 = vmatpush1.bf16.msra.mxu0 %v1179
        %1241 = vmatprep.subr.bf16.mxu0 0
        %1242 = vmatpush1.bf16.msra.mxu0 %v1180
        %1243 = vmatprep.subr.bf16.mxu0 0
        %1244 = vmatpush1.bf16.msra.mxu0 %v1181
        %1245 = vmatprep.subr.bf16.mxu0 0
        %1246 = vmatpush1.bf16.msra.mxu0 %v1182
        %1247 = vmatprep.mubr.bf16.mxu0 %v1014
        %1248 = vmatmul.mubr.bf16.gmra.mrb[0].mxu0 %v1013
        %v1249 = vpop.f32.mrb[0].mxu0
        %v1250 = vadd.f32 %v1069, %v1249
        %v1251 = vpop.f32.mrb[0].mxu0
        %v1252 = vpop.f32.mrb[0].mxu0
        %v1253 = vpop.f32.mrb[0].mxu0
        %1254 = vdwg.mxu0
        %1255 = vmatprep.subr.bf16.mxu0 0
        %1256 = vmatpush1.bf16.msra.mxu0 %v1183
        %1257 = vmatprep.subr.bf16.mxu0 0
        %1258 = vmatpush1.bf16.msra.mxu0 %v1184
        %1259 = vmatprep.subr.bf16.mxu0 0
        %1260 = vmatpush1.bf16.msra.mxu0 %v1185
        %1261 = vmatprep.subr.bf16.mxu0 0
        %1262 = vmatpush1.bf16.msra.mxu0 %v1186
        %1263 = vmatprep.subr.bf16.mxu0 0
        %1264 = vmatpush1.bf16.msra.mxu0 %v1187
        %1265 = vmatprep.subr.bf16.mxu0 0
        %1266 = vmatpush1.bf16.msra.mxu0 %v1188
        %1267 = vmatprep.subr.bf16.mxu0 0
        %1268 = vmatpush1.bf16.msra.mxu0 %v1189
        %1269 = vmatprep.subr.bf16.mxu0 0
        %1270 = vmatpush1.bf16.msra.mxu0 %v1190
        %1271 = vmatprep.subr.bf16.mxu0 0
        %1272 = vmatpush1.bf16.msra.mxu0 0
        %1273 = vmatprep.subr.bf16.mxu0 0
        %1274 = vmatpush1.bf16.msra.mxu0 0
        %1275 = vmatprep.subr.bf16.mxu0 0
        %1276 = vmatpush1.bf16.msra.mxu0 0
        %1277 = vmatprep.subr.bf16.mxu0 0
        %1278 = vmatpush1.bf16.msra.mxu0 0
        %1279 = vmatprep.subr.bf16.mxu0 0
        %1280 = vmatpush1.bf16.msra.mxu0 0
        %1281 = vmatprep.subr.bf16.mxu0 0
        %1282 = vmatpush1.bf16.msra.mxu0 0
        %1283 = vmatprep.subr.bf16.mxu0 0
        %1284 = vmatpush1.bf16.msra.mxu0 0
        %1285 = vmatprep.subr.bf16.mxu0 0
        %1286 = vmatpush1.bf16.msra.mxu0 0
        %1287 = vmatprep.mubr.bf16.mxu0 0
        %1288 = vmatmul.mubr.bf16.gmra.mrb[0].mxu0 %v1015
        %v1289 = vpop.f32.mrb[0].mxu0
        %v1290 = vadd.f32 %v1250, %v1289
        %v1291 = vpop.f32.mrb[0].mxu0
        %v1292 = vpop.f32.mrb[0].mxu0
        %v1293 = vpop.f32.mrb[0].mxu0
        %1294 = vdwg.mxu0
        %v1295 = vld [vmem:[%s7] sm:$0x1]
        %v1297 = vlaneseq
        %v1298 = vshrl.u32 %v1297, 7
        %v1299 = vsub.s32 0, %v1298
        %v1300 = vrot.slane %v1295, %v1299
        %v1302 = vmul.f32 %v1290, %v1300
        %v1303 = vand.u32 2147483647, %v1302
        %vm1304 = vcmp.le.f32.partialorder %v1303, 0.7853982
        %vm1305 = vcmp.lt.s32.totalorder %v1302, 0
        %v1306 = vand.u32 %v1302, 2139095040
        %v1307 = vshrl.u32 %v1306, 23
        %v1308 = vsub.s32 %v1307, 127
        %v1309 = vand.u32 2147483647, %v1302
        %v1310 = vand.u32 %v1309, 8388607
        %v1311 = vor.u32 %v1310, 8388608
        %v1312 = vsub.s32 0, %v1311
        %v1313 = vadd.s32 %v1308, 1
        %vm1314 = vcmp.gt.s32.totalorder %v1313, 0
        %v1315 = vsel %vm1314, %v1313, 0
        %v1316 = vshrl.u32 %v1315, 5
        %v1317 = vand.u32 %v1315, 31
        %v1318 = vsub.s32 32, %v1317
        %v1319 = vshrl.u32 683565275, %v1318
        %v1320 = vshll.u32 683565275, %v1317
        %v1321 = vshrl.u32 2475754826, %v1318
        %v1322 = vor.u32 %v1320, %v1321
        %v1323 = vshll.u32 2475754826, %v1317
        %v1324 = vshrl.u32 2131351028, %v1318
        %v1325 = vor.u32 %v1323, %v1324
        %v1326 = vshll.u32 2131351028, %v1317
        %v1327 = vshrl.u32 2102212464, %v1318
        %v1328 = vor.u32 %v1326, %v1327
        %v1329 = vshll.u32 2102212464, %v1317
        %v1330 = vshrl.u32 920167782, %v1318
        %v1331 = vor.u32 %v1329, %v1330
        %v1332 = vshll.u32 920167782, %v1317
        %v1333 = vshrl.u32 1326507024, %v1318
        %v1334 = vor.u32 %v1332, %v1333
        %vm1335 = vcmp.lt.s32.totalorder %v1316, 1
        %vm1336 = vcmp.lt.s32.totalorder %v1316, 2
        %vm1337 = vcmp.lt.s32.totalorder %v1316, 3
        %vm1338 = vcmp.lt.s32.totalorder %v1316, 4
        %v1339 = vsel %vm1335, %v1319, %v1322
        %v1340 = vsel %vm1338, %v1328, 2102212464
        %v1341 = vsel %vm1337, %v1325, %v1340
        %v1342 = vsel %vm1336, %v1339, %v1341
        %v1343 = vsel %vm1335, %v1322, %v1325
        %v1344 = vsel %vm1338, %v1331, 920167782
        %v1345 = vsel %vm1337, %v1328, %v1344
        %v1346 = vsel %vm1336, %v1343, %v1345
        %v1347 = vsel %vm1335, %v1325, %v1328
        %v1348 = vsel %vm1338, %v1334, 1326507024
        %v1349 = vsel %vm1337, %v1331, %v1348
        %v1350 = vsel %vm1336, %v1347, %v1349
        %v1351 = vshll.u32 %v1311, 8
        %v1352 = vmul.u32.u64.compose %v1351, %v1350
        %v1353 = vextract.low.u32 %v1352
        %v1354 = vextract.high.u32 %v1352
        %v1355 = vmul.u32.u64.compose %v1351, %v1346
        %v1356 = vextract.low.u32 %v1355
        %v1357 = vextract.high.u32 %v1355
        %v1358 = vmul.u32 %v1351, %v1342
        %v1359 = vadd.s32 %v1354, %v1356
        %vm1360 = vc.u32 %v1354, %v1356
        %v1361 = vadd.s32 %v1357, 1
        %v1362 = vsel %vm1360, %v1361, %v1357
        %v1363 = vadd.s32 %v1358, %v1362
        %v1364 = vadd.s32 %v1363, 536870912
        %v1365 = vshrl.u32 %v1364, 30
        %v1366 = vshll.u32 %v1365, 30
        %v1367 = vsub.s32 %v1363, %v1366
        %vm1368 = vcmp.lt.s32.totalorder %v1367, 0
        %v1369 = vsub.s32 0, %v1367
        %v1370 = vsel %vm1368, %v1369, %v1367
        %v1371 = vclz %v1370
        %v1372 = vsub.s32 %v1371, 2
        %vm1373 = vcmp.gt.s32.totalorder 0, %v1372
        %v1374 = vsel %vm1373, 0, %v1372
        %v1375 = vsub.s32 32, %v1374
        %v1376 = vshll.u32 %v1367, %v1374
        %v1377 = vshrl.u32 %v1359, %v1375
        %v1378 = vor.u32 %v1376, %v1377
        %v1379 = vsub.s32 4294967266, %v1374
        %v1380 = vadd.s32 %v1379, 127
        %v1381 = vshll.u32 %v1380, 23
        %v1382 = vor.u32 4788187, %v1381
        %v1383 = vand.u32 2147483647, %v1382
        %v1385 = vcvt.s32.f32 %v1378
        %v1386 = vmul.f32 %v1385, %v1383
        %v1387 = vxor.u32 %v1386, 2147483648
        %v1388 = vsel %vm1305, %v1387, %v1386
        %v1389 = vsub.s32 4, %v1365
        %v1390 = vsel %vm1305, %v1389, %v1365
        %v1391 = vsel %vm1304, %v1302, %v1388
        %v1392 = vsel %vm1304, 0, %v1390
        %v1393 = vcosq.f32.pop %v1391
        %v1394 = vsinq.f32.pop %v1391
        %vm1395 = vweird.f32 %v1302
        %v1396 = vadd.s32 %v1392, 3
        %v1397 = vand.u32 %v1396, 3
        %vm1398 = vcmp.lt.s32.totalorder %v1397, 2
        %vm1399 = vcmp.eq.s32.totalorder %v1397, 0
        %v1400 = vxor.u32 %v1394, 2147483648
        %v1401 = vsel %vm1399, %v1393, %v1400
        %vm1402 = vcmp.eq.s32.totalorder %v1397, 2
        %v1403 = vxor.u32 %v1393, 2147483648
        %v1404 = vsel %vm1402, %v1403, %v1394
        %v1405 = vsel %vm1398, %v1401, %v1404
        %v1406 = vsel %vm1395, nan, %v1405
        %v1407 = vld [vmem:[%s8] sm:$0x1]
        %v1409 = vlaneseq
        %v1410 = vshrl.u32 %v1409, 7
        %v1411 = vsub.s32 0, %v1410
        %v1412 = vrot.slane %v1407, %v1411
        %v1414 = vmul.f32 %v1412, %v1406
        %v1415 = vmul.f32 %v1414, %v1406
        %v1416 = vadd.f32 %v1290, %v1415
        %v1417 = vpack.c.bf16 %v1416, %v1416
        %v1418 = vld [vmem:[#allocation10] sm:$0xf]
        %v1419 = vld [vmem:[#allocation10 + $0x4] sm:$0xf]
        %v1420 = vld [vmem:[#allocation10 + $0x8] sm:$0xf]
        %v1421 = vld [vmem:[#allocation10 + $0xc] sm:$0xf]
        %v1422 = vld [vmem:[#allocation10 + $0x10] sm:$0xf]
        %v1423 = vld [vmem:[#allocation10 + $0x14] sm:$0xf]
        %v1424 = vld [vmem:[#allocation10 + $0x18] sm:$0xf]
        %v1425 = vld [vmem:[#allocation10 + $0x1c] sm:$0xf]
        %v1426 = vld [vmem:[#allocation10 + $0x20] sm:$0xf]
        %v1427 = vld [vmem:[#allocation10 + $0x24] sm:$0xf]
        %v1428 = vld [vmem:[#allocation10 + $0x28] sm:$0xf]
        %v1429 = vld [vmem:[#allocation10 + $0x2c] sm:$0xf]
        %v1430 = vld [vmem:[#allocation10 + $0x30] sm:$0xf]
        %v1431 = vld [vmem:[#allocation10 + $0x34] sm:$0xf]
        %v1432 = vld [vmem:[#allocation10 + $0x38] sm:$0xf]
        %v1433 = vld [vmem:[#allocation10 + $0x3c] sm:$0xf]
        %v1434 = vld [vmem:[%s10] sm:$0x1]
        %v1436 = vlaneseq
        %v1437 = vshrl.u32 %v1436, 7
        %v1438 = vsub.s32 0, %v1437
        %v1439 = vrot.slane %v1434, %v1438
        %v1457 = vunpack.c.l.b16 %v1418
        %v1458 = vunpack.c.l.b16 %v1419
        %v1459 = vunpack.c.l.b16 %v1420
        %v1460 = vunpack.c.l.b16 %v1421
        %v1461 = vunpack.c.l.b16 %v1422
        %v1462 = vunpack.c.l.b16 %v1423
        %v1463 = vunpack.c.l.b16 %v1424
        %v1464 = vunpack.c.l.b16 %v1425
        %v1465 = vunpack.c.l.b16 %v1426
        %v1466 = vunpack.c.l.b16 %v1427
        %v1467 = vunpack.c.l.b16 %v1428
        %v1468 = vunpack.c.l.b16 %v1429
        %v1469 = vunpack.c.l.b16 %v1430
        %v1470 = vunpack.c.l.b16 %v1431
        %v1471 = vunpack.c.l.b16 %v1432
        %v1472 = vunpack.c.l.b16 %v1433
        %v1473 = vpack.c.b16 %v1458, %v1457
        %v1474 = vpack.c.b16 %v1460, %v1459
        %v1475 = vpack.c.b16 %v1462, %v1461
        %v1476 = vpack.c.b16 %v1464, %v1463
        %v1477 = vpack.c.b16 %v1466, %v1465
        %v1478 = vpack.c.b16 %v1468, %v1467
        %v1479 = vpack.c.b16 %v1470, %v1469
        %v1480 = vpack.c.b16 %v1472, %v1471
        %1489 = vmatprep.subr.bf16.mxu0 0
        %1490 = vmatpush1.bf16.msra.mxu0 %v1473
        %1491 = vmatprep.subr.bf16.mxu0 0
        %1492 = vmatpush1.bf16.msra.mxu0 %v1474
        %1493 = vmatprep.subr.bf16.mxu0 0
        %1494 = vmatpush1.bf16.msra.mxu0 %v1475
        %1495 = vmatprep.subr.bf16.mxu0 0
        %1496 = vmatpush1.bf16.msra.mxu0 %v1476
        %1497 = vmatprep.subr.bf16.mxu0 0
        %1498 = vmatpush1.bf16.msra.mxu0 %v1477
        %1499 = vmatprep.subr.bf16.mxu0 0
        %1500 = vmatpush1.bf16.msra.mxu0 %v1478
        %1501 = vmatprep.subr.bf16.mxu0 0
        %1502 = vmatpush1.bf16.msra.mxu0 %v1479
        %1503 = vmatprep.subr.bf16.mxu0 0
        %1504 = vmatpush1.bf16.msra.mxu0 %v1480
        %1505 = vmatprep.subr.bf16.mxu0 0
        %1506 = vmatpush1.bf16.msra.mxu0 0
        %1507 = vmatprep.subr.bf16.mxu0 0
        %1508 = vmatpush1.bf16.msra.mxu0 0
        %1509 = vmatprep.subr.bf16.mxu0 0
        %1510 = vmatpush1.bf16.msra.mxu0 0
        %1511 = vmatprep.subr.bf16.mxu0 0
        %1512 = vmatpush1.bf16.msra.mxu0 0
        %1513 = vmatprep.subr.bf16.mxu0 0
        %1514 = vmatpush1.bf16.msra.mxu0 0
        %1515 = vmatprep.subr.bf16.mxu0 0
        %1516 = vmatpush1.bf16.msra.mxu0 0
        %1517 = vmatprep.subr.bf16.mxu0 0
        %1518 = vmatpush1.bf16.msra.mxu0 0
        %1519 = vmatprep.subr.bf16.mxu0 0
        %1520 = vmatpush1.bf16.msra.mxu0 0
        %1521 = vmatprep.mubr.bf16.mxu0 0
        %1522 = vmatmul.mubr.bf16.gmra.mrb[0].mxu0 %v1417
        %v1523 = vpop.f32.mrb[0].mxu0
        %v1524 = vadd.f32 %v1439, %v1523
        %v1525 = vpop.f32.mrb[0].mxu0
        %v1526 = vpop.f32.mrb[0].mxu0
        %v1527 = vpop.f32.mrb[0].mxu0
        %1528 = vdwg.mxu0
        %v1529 = vpack.c.bf16 %v1524, %v1524
        %v1530 = vld [vmem:[#allocation11] sm:$0xf]
        %v1531 = vld [vmem:[#allocation11 + $0x4] sm:$0xf]
        %v1532 = vld [vmem:[#allocation11 + $0x8] sm:$0xf]
        %v1533 = vld [vmem:[#allocation11 + $0xc] sm:$0xf]
        %v1534 = vld [vmem:[#allocation11 + $0x10] sm:$0xf]
        %v1535 = vld [vmem:[#allocation11 + $0x14] sm:$0xf]
        %v1536 = vld [vmem:[#allocation11 + $0x18] sm:$0xf]
        %v1537 = vld [vmem:[#allocation11 + $0x1c] sm:$0xf]
        %v1538 = vld [vmem:[#allocation11 + $0x20] sm:$0xf]
        %v1539 = vld [vmem:[#allocation11 + $0x24] sm:$0xf]
        %v1540 = vld [vmem:[#allocation11 + $0x28] sm:$0xf]
        %v1541 = vld [vmem:[#allocation11 + $0x2c] sm:$0xf]
        %v1542 = vld [vmem:[#allocation11 + $0x30] sm:$0xf]
        %v1543 = vld [vmem:[#allocation11 + $0x34] sm:$0xf]
        %v1544 = vld [vmem:[#allocation11 + $0x38] sm:$0xf]
        %v1545 = vld [vmem:[#allocation11 + $0x3c] sm:$0xf]
        %v1546 = vld [vmem:[%s12] sm:$0x1]
        %v1548 = vlaneseq
        %v1549 = vshrl.u32 %v1548, 7
        %v1550 = vsub.s32 0, %v1549
        %v1551 = vrot.slane %v1546, %v1550
        %v1569 = vunpack.c.l.b16 %v1530
        %v1570 = vunpack.c.l.b16 %v1531
        %v1571 = vunpack.c.l.b16 %v1532
        %v1572 = vunpack.c.l.b16 %v1533
        %v1573 = vunpack.c.l.b16 %v1534
        %v1574 = vunpack.c.l.b16 %v1535
        %v1575 = vunpack.c.l.b16 %v1536
        %v1576 = vunpack.c.l.b16 %v1537
        %v1577 = vunpack.c.l.b16 %v1538
        %v1578 = vunpack.c.l.b16 %v1539
        %v1579 = vunpack.c.l.b16 %v1540
        %v1580 = vunpack.c.l.b16 %v1541
        %v1581 = vunpack.c.l.b16 %v1542
        %v1582 = vunpack.c.l.b16 %v1543
        %v1583 = vunpack.c.l.b16 %v1544
        %v1584 = vunpack.c.l.b16 %v1545
        %v1585 = vpack.c.b16 %v1570, %v1569
        %v1586 = vpack.c.b16 %v1572, %v1571
        %v1587 = vpack.c.b16 %v1574, %v1573
        %v1588 = vpack.c.b16 %v1576, %v1575
        %v1589 = vpack.c.b16 %v1578, %v1577
        %v1590 = vpack.c.b16 %v1580, %v1579
        %v1591 = vpack.c.b16 %v1582, %v1581
        %v1592 = vpack.c.b16 %v1584, %v1583
        %1601 = vmatprep.subr.bf16.mxu0 0
        %1602 = vmatpush1.bf16.msra.mxu0 %v1585
        %1603 = vmatprep.subr.bf16.mxu0 0
        %1604 = vmatpush1.bf16.msra.mxu0 %v1586
        %1605 = vmatprep.subr.bf16.mxu0 0
        %1606 = vmatpush1.bf16.msra.mxu0 %v1587
        %1607 = vmatprep.subr.bf16.mxu0 0
        %1608 = vmatpush1.bf16.msra.mxu0 %v1588
        %1609 = vmatprep.subr.bf16.mxu0 0
        %1610 = vmatpush1.bf16.msra.mxu0 %v1589
        %1611 = vmatprep.subr.bf16.mxu0 0
        %1612 = vmatpush1.bf16.msra.mxu0 %v1590
        %1613 = vmatprep.subr.bf16.mxu0 0
        %1614 = vmatpush1.bf16.msra.mxu0 %v1591
        %1615 = vmatprep.subr.bf16.mxu0 0
        %1616 = vmatpush1.bf16.msra.mxu0 %v1592
        %1617 = vmatprep.subr.bf16.mxu0 0
        %1618 = vmatpush1.bf16.msra.mxu0 0
        %1619 = vmatprep.subr.bf16.mxu0 0
        %1620 = vmatpush1.bf16.msra.mxu0 0
        %1621 = vmatprep.subr.bf16.mxu0 0
        %1622 = vmatpush1.bf16.msra.mxu0 0
        %1623 = vmatprep.subr.bf16.mxu0 0
        %1624 = vmatpush1.bf16.msra.mxu0 0
        %1625 = vmatprep.subr.bf16.mxu0 0
        %1626 = vmatpush1.bf16.msra.mxu0 0
        %1627 = vmatprep.subr.bf16.mxu0 0
        %1628 = vmatpush1.bf16.msra.mxu0 0
        %1629 = vmatprep.subr.bf16.mxu0 0
        %1630 = vmatpush1.bf16.msra.mxu0 0
        %1631 = vmatprep.subr.bf16.mxu0 0
        %1632 = vmatpush1.bf16.msra.mxu0 0
        %1633 = vmatprep.mubr.bf16.mxu0 0
        %1634 = vmatmul.mubr.bf16.gmra.mrb[0].mxu0 %v1529
        %v1635 = vpop.f32.mrb[0].mxu0
        %v1636 = vadd.f32 %v1551, %v1635
        %v1637 = vpop.f32.mrb[0].mxu0
        %v1638 = vpop.f32.mrb[0].mxu0
        %v1639 = vpop.f32.mrb[0].mxu0
        %1640 = vdwg.mxu0
        %v1641 = vadd.f32 %v622, %v1636
        %1642 = vst [vmem:[%s614] sm:$0xff] %v1641
        %s1643 = sand.u32 %s363, 1
        %s1644 = scalar_lea.sflag [#allocation4], %s1643
        %s1645 = sand.u32 %s363, 1
        %s1646 = smul.addr %s1645, 8
        %s1647 = scalar_lea.vmem [#allocation13], %s1646
        // Predicated region
        $region97: #{tpu_custom_call.1} parent=71 // pred_check
          %p1648 = pneg %p373
        $region98: #{tpu_custom_call.1} parent=71 // pred_check_branch
          %1650 = sbr.rel (%p1648) target = $region100
        $region99: #{tpu_custom_call.1} parent=71 // pred_region
          %s1652 = ssub.s32 128, 128
          %1653 = vsyncadd %s1644, %s1652
          %s1654 = smul.addr %s39, 2
          %s1655 = sadd.s32 %s40, %s1654
          %s1656 = smul.addr %s1655, 128
          %s1657 = scalar_lea.hbm %s13, %s1656
          %s1659 = sshll.u32 %s1647, 4
          %s1660 = int_to_ptr.vmem [resolvable:$true] %s1659
          %1662 = dma.vmem_to_hbm [thread:$0]  %s1660, 128, %s1657, %s1644
        $region100: #{tpu_custom_call.1} parent=71 // pred_fallthru
          _
      $region72: #{tpu_custom_call.1} parent=5 // pred_fallthru
        _
      %p1663 = scmp.le.s32.totalorder 2, %s30
      // Predicated region
      $region101: #{tpu_custom_call.1} parent=5 // pred_check
        %p1664 = pneg %p1663
      $region102: #{tpu_custom_call.1} parent=5 // pred_check_branch
        %1666 = sbr.rel (%p1664) target = $region104
      $region103: #{tpu_custom_call.1} parent=5 // pred_region
        %s1667 = ssub.s32 %s30, 2
        // Predicated region
        $region105: #{tpu_custom_call.1} parent=103 // pred_check
          %p1668 = pneg %p379
        $region106: #{tpu_custom_call.1} parent=103 // pred_check_branch
          %1670 = sbr.rel (%p1668) target = $region108
        $region107: #{tpu_custom_call.1} parent=103 // pred_region
          %s1671 = sand.u32 %s364, 1
          %s1672 = scalar_lea.sflag [#allocation4], %s1671
          %s1673 = sand.u32 %s364, 1
          %s1674 = smul.addr %s1673, 8
          %s1675 = scalar_lea.vmem [#allocation13], %s1674
          %1676 = dma.done %s1672, 128
        $region108: #{tpu_custom_call.1} parent=103 // pred_fallthru
          _
      $region104: #{tpu_custom_call.1} parent=5 // pred_fallthru
        _
    $region6: #{tpu_custom_call.1} parent=1 // loop_footer
      %s34 = sadd.s32 1, %s30
    $region7: #{tpu_custom_call.1} parent=1 // loop_footer_branch
      %29 = sbr.rel target = $region3
    $region8: #{tpu_custom_call.1} parent=1 // loop_exit
      _
    %1677 = vsyncpa [#allocation3], 1
    %s1678 = scalar_lea.sflag [#allocation3], 1
    %1679 = vsyncpa %s1678, 1
    %1680 = vsyncpa [#allocation6], 1
    %s1681 = scalar_lea.sflag [#allocation6], 1
    %1682 = vsyncpa %s1681, 1
    %1683 = vsyncpa [#allocation9], 1
    %1684 = vsyncpa [#allocation12], 1
    %1685 = vsyncpa [#allocation4], 1
    %s1686 = scalar_lea.sflag [#allocation4], 1
    %1687 = vsyncpa %s1686, 1

</llo_original>
